<compile_context>
chip_gen: v6e
topology: v6e:2x2x1
jax: 0.10.0
libtpu: 0.0.40
codegen_flags: <defaults>
</compile_context>

<pallas_src>
import math
import jax
import jax.numpy as jnp
from jax import lax
from jax.experimental import pallas as pl
from jax.experimental.pallas import tpu as pltpu

N = 16          # nodes per graph
D = 32          # in_node_dim
H = 4           # num_heads
C = 8           # hidden_node_dim per head;  H * C == D (needed by residual)
ED = 4          # edge_dim
L = 2           # num_layers
HC = H * C      # 32
HN = H * N      # 64
EPS = 1e-6
NEG = -1e30

# ---- packed param slab layout -------------------------------------------------
# pw32  [R32, 32]: hsel | ln_a | ln_b | pad | wlin | blin | pad | wde
OFF_HSEL = 0                    # [HN, 32]      head selector (h==h')
OFF_LNA = 64                    # [L, 32]
OFF_LNB = 66                    # [L, 32]
OFF_WLIN = 72                   # [D, 32]
OFF_BLIN = 104                  # [1, 32]
OFF_WDE = 112                   # [L*ED*HN, 32] head-masked lin_edge weights
R32 = OFF_WDE + L * ED * HN     # 624
# pw128 [R128, 128]: wqkvs (q|k|v|skip, scale folded into q block) | bqkvs
OFF_B128 = L * D                # 64
R128 = L * D + L                # 66


def nmr_kernel(x_ref, me_ref, pw32_ref, pw128_ref, o_ref):
    x = x_ref[0]                                                   # [N, D]

    # per-graph data, expanded to the lane-dense stacked-head layout in-kernel
    mask_h = jnp.concatenate([me_ref[0, 0:N, :]] * H, axis=1)      # [N, H*N]
    et_h = [jnp.concatenate([me_ref[0, (1 + d) * N:(2 + d) * N, :]] * H, axis=1)
            for d in range(ED)]                                    # ED x [N, H*N]

    hsel = pw32_ref[OFF_HSEL:OFF_HSEL + HN, :]                     # [HN, HC]

    for l in range(L):                                             # layers unrolled
        # --- pre-norm LayerNorm (unbiased std, (std + eps) denominator) ---
        ln_a = pw32_ref[OFF_LNA + l:OFF_LNA + l + 1, :]            # [1, D]
        ln_b = pw32_ref[OFF_LNB + l:OFF_LNB + l + 1, :]
        mean = jnp.mean(x, axis=-1, keepdims=True)
        xc = x - mean
        var = jnp.sum(xc * xc, axis=-1, keepdims=True) * (1.0 / (D - 1))
        inv_std = pl.reciprocal(jnp.sqrt(var) + EPS, approx=False)
        xn = ln_a * (xc * inv_std) + ln_b                          # [N, D]

        # --- fused q|k|v|skip projection (scale already folded into q) ---
        wqkvs = pw128_ref[l * D:(l + 1) * D, :]                    # [D, 4*HC]
        bqkvs = pw128_ref[OFF_B128 + l:OFF_B128 + l + 1, :]        # [1, 4*HC]
        qkvs = jnp.dot(xn, wqkvs, preferred_element_type=jnp.float32) + bqkvs
        q = qkvs[:, 0:HC]
        k = qkvs[:, HC:2 * HC]
        v = qkvs[:, 2 * HC:3 * HC]
        skip = qkvs[:, 3 * HC:4 * HC]

        # head-masked lin_edge weights for this layer (d-major rows)
        wde_all = pw32_ref[OFF_WDE + l * ED * HN:
                           OFF_WDE + (l + 1) * ED * HN, :]         # [ED*HN, HC]

        # --- stacked-head scores s[i, h*N+j] = q_h[i].k_h[j] (+ edge gate) ---
        kbd = jnp.concatenate([k] * H, axis=0) * hsel              # [HN, HC]
        s = lax.dot_general(q, kbd, (((1,), (1,)), ((), ())),
                            preferred_element_type=jnp.float32)    # [N, HN]
        for d in range(ED):
            wde_d = wde_all[d * HN:(d + 1) * HN, :]                # [HN, HC]
            gate = lax.dot_general(q, wde_d, (((1,), (1,)), ((), ())),
                                   preferred_element_type=jnp.float32)
            s = s + gate * et_h[d]

        # --- masked softmax over incoming edges j (rows w/o edges -> zeros) ---
        s = jnp.where(mask_h > 0.5, s, NEG)
        m = jnp.max(s, axis=-1, keepdims=True)                     # per-row shift
        p = jnp.exp(s - m) * mask_h                                # [N, HN]

        den = jnp.dot(p, hsel, preferred_element_type=jnp.float32)     # [N, HC]
        inv = pl.reciprocal(jnp.maximum(den, 1e-30), approx=True)

        # --- aggregation: node values + fused edge-value reduction ---
        vbd = jnp.concatenate([v] * H, axis=0) * hsel              # [HN, HC]
        agg = jnp.dot(p, vbd, preferred_element_type=jnp.float32)  # [N, HC]
        pe = jnp.concatenate([p * et_h[d] for d in range(ED)], axis=1)  # [N, ED*HN]
        agg = agg + jnp.dot(pe, wde_all, preferred_element_type=jnp.float32)

        # TODO(synk): dropout (p=0.1) on alpha / SublayerConnection omitted (eval mode).
        x = x + agg * inv + skip                                   # residual

    wlin = pw32_ref[OFF_WLIN:OFF_WLIN + D, :]
    blin = pw32_ref[OFF_BLIN:OFF_BLIN + 1, :]
    o_ref[0] = jnp.dot(x, wlin, preferred_element_type=jnp.float32) + blin


def pack_params(prm):
    """Zero-runtime-cost repack of the natural params into two lane-dense slabs."""
    scale = 1.0 / math.sqrt(C)
    wqkvs = jnp.concatenate([prm["wq"] * scale, prm["wk"], prm["wv"], prm["wsk"]],
                            axis=-1)                                # [L, D, 4HC]
    bqkvs = jnp.concatenate([prm["bq"] * scale, prm["bk"], prm["bv"], prm["bsk"]],
                            axis=-1)                                # [L, 1, 4HC]
    pw128 = jnp.concatenate([wqkvs.reshape(L * D, 4 * HC),
                             bqkvs.reshape(L, 4 * HC)], axis=0)     # [66, 128]

    row_h = jnp.arange(HN)[:, None] // N
    col_h = jnp.arange(HC)[None, :] // C
    hsel = (row_h == col_h).astype(jnp.float32)                     # [HN, HC]
    # wde[l, d, h*N+j, hc] = (head match) * wedge[l, d, hc]
    wde = (hsel[None, None, :, :] * prm["wedge"][:, :, None, :]).reshape(
        L * ED * HN, HC)

    z4 = jnp.zeros((4, D), jnp.float32)
    z7 = jnp.zeros((7, D), jnp.float32)
    pw32 = jnp.concatenate([hsel,                # rows   0:64
                            prm["ln_a"],         # rows  64:66
                            prm["ln_b"],         # rows  66:68
                            z4,                  # rows  68:72
                            prm["wlin"],         # rows  72:104
                            prm["blin"],         # row  104
                            z7,                  # rows 105:112
                            wde], axis=0)        # rows 112:624
    return pw32, pw128


def nmr_graph_encoder(x, mask, dense_a, prm):
    """x: [B,N,D]; mask/dense_a: [B,N,N] dense scatter of edge_index / edge_attr."""
    bsz = x.shape[0]
    # edge_embed MLP (preprocessing glue, plain JAX, next to the sparse->dense scatter)
    h1 = dense_a[..., None] * prm["w1e"] + prm["b1e"]               # [B,N,N,2ED]
    h1 = h1 * jax.nn.sigmoid(h1)
    e_emb = jnp.dot(h1, prm["w2e"]) + prm["b2e"]                    # [B,N,N,ED]
    me = jnp.concatenate([mask[:, None, :, :],
                          jnp.transpose(e_emb, (0, 3, 1, 2))], axis=1)
    me = me.reshape(bsz, (1 + ED) * N, N)                           # mask | e-channels

    pw32, pw128 = pack_params(prm)

    return pl.pallas_call(
        nmr_kernel,
        out_shape=jax.ShapeDtypeStruct((bsz, N, D), jnp.float32),
        grid=(bsz,),
        in_specs=[
            pl.BlockSpec((1, N, D), lambda b: (b, 0, 0)),
            pl.BlockSpec((1, (1 + ED) * N, N), lambda b: (b, 0, 0)),
            pl.BlockSpec((R32, D), lambda b: (0, 0)),
            pl.BlockSpec((R128, 4 * HC), lambda b: (0, 0)),
        ],
        out_specs=pl.BlockSpec((1, N, D), lambda b: (b, 0, 0)),
        compiler_params=pltpu.CompilerParams(
            dimension_semantics=("parallel",)),
    )(x, me, pw32, pw128)


def init_params(key):
    ks = jax.random.split(key, 16)

    def nrm(k, shape, s=0.1):
        return (s * jax.random.normal(k, shape)).astype(jnp.float32)

    prm = {
        "w1e": nrm(ks[0], (2 * ED,)),
        "b1e": nrm(ks[1], (2 * ED,)),
        "w2e": nrm(ks[2], (2 * ED, ED)),
        "b2e": nrm(ks[3], (ED,)),
        "ln_a": jnp.ones((L, D), jnp.float32),
        "ln_b": jnp.zeros((L, D), jnp.float32),
        "wedge": nrm(ks[4], (L, ED, HC)),
        "wlin": nrm(ks[5], (D, D)),
        "blin": nrm(ks[6], (1, D)),
    }
    for idx, name in enumerate(["wq", "wk", "wv", "wsk"]):
        prm[name] = nrm(ks[7 + 2 * idx], (L, D, HC))
        prm["b" + name[1:]] = nrm(ks[8 + 2 * idx], (L, 1, HC))
    return prm


def ref_forward_single(x, mask, dense_a, prm):
    """Pure-JAX reference (one graph) with identical dense-masked math."""
    h1 = dense_a[..., None] * prm["w1e"] + prm["b1e"]
    h1 = h1 * jax.nn.sigmoid(h1)
    e_emb = jnp.dot(h1, prm["w2e"]) + prm["b2e"]                    # [N,N,ED]
    for l in range(L):
        mean = jnp.mean(x, axis=-1, keepdims=True)
        xc = x - mean
        var = jnp.sum(xc * xc, axis=-1, keepdims=True) / (D - 1)
        xn = prm["ln_a"][l] * xc / (jnp.sqrt(var) + EPS) + prm["ln_b"][l]
        q = (xn @ prm["wq"][l] + prm["bq"][l]).reshape(N, H, C)
        k = (xn @ prm["wk"][l] + prm["bk"][l]).reshape(N, H, C)
        v = (xn @ prm["wv"][l] + prm["bv"][l]).reshape(N, H, C)
        skip = xn @ prm["wsk"][l] + prm["bsk"][l]
        e = jnp.einsum("ijd,dz->ijz", e_emb, prm["wedge"][l]).reshape(N, N, H, C)
        s = jnp.einsum("ihc,jhc->ijh", q, k) + jnp.einsum("ihc,ijhc->ijh", q, e)
        s = s / math.sqrt(C)
        s = jnp.where(mask[:, :, None] > 0.5, s, NEG)
        m = jnp.max(s, axis=1, keepdims=True)
        pr = jnp.exp(s - m) * mask[:, :, None]
        den = jnp.sum(pr, axis=1, keepdims=True)
        alpha = pr / jnp.maximum(den, 1e-30)
        out = (jnp.einsum("ijh,jhc->ihc", alpha, v)
               + jnp.einsum("ijh,ijhc->ihc", alpha, e))
        x = x + out.reshape(N, HC) + skip
    return x @ prm["wlin"] + prm["blin"]


if __name__ == "__main__":
    B = 8                                    # graphs batched into one pallas_call
    key = jax.random.PRNGKey(0)
    kx, km, ke, kp = jax.random.split(key, 4)

    x = jax.random.normal(kx, (B, N, D), jnp.float32)
    # dense per-graph adjacency (dst, src) and edge-attr maps (random graphs)
    mask = (jax.random.uniform(km, (B, N, N)) < 0.35).astype(jnp.float32)
    dense_a = mask * jax.random.normal(ke, (B, N, N), jnp.float32)

    params = init_params(kp)

    fwd = jax.jit(nmr_graph_encoder)
    out = jax.block_until_ready(fwd(x, mask, dense_a, params))
    assert out.shape == (B, N, D)

    ref = jax.vmap(ref_forward_single, in_axes=(0, 0, 0, None))(x, mask, dense_a,
                                                                params)
    err = float(jnp.max(jnp.abs(out - ref)))
    assert bool(jnp.allclose(out, ref, atol=2e-3, rtol=2e-3)), f"max abs err {err}"
    print("KERNEL_OK")
</pallas_src>

<mosaic_0001>
module attributes {stable_mosaic.version = 11 : i64} {
  func.func @nmr_kernel(%arg0: i32, %arg1: memref<1x16x32xf32, #tpu.memory_space<vmem>>, %arg2: memref<1x80x16xf32, #tpu.memory_space<vmem>>, %arg3: memref<624x32xf32, #tpu.memory_space<vmem>>, %arg4: memref<66x128xf32, #tpu.memory_space<vmem>>, %arg5: memref<1x16x32xf32, #tpu.memory_space<vmem>>) attributes {dimension_semantics = [#tpu.dimension_semantics<parallel>], iteration_bounds = array<i64: 8>, scalar_prefetch = 0 : i64, scratch_operands = 0 : i64, tpu.core_type = #tpu.core_type<tc>, window_params = [{transform_indices = @transform_0, window_bounds = array<i64: 1, 16, 32>}, {transform_indices = @transform_1, window_bounds = array<i64: 1, 80, 16>}, {pipeline_mode = #tpu.pipeline_mode<synchronous>, transform_indices = @transform_2, window_bounds = array<i64: 624, 32>}, {pipeline_mode = #tpu.pipeline_mode<synchronous>, transform_indices = @transform_3, window_bounds = array<i64: 66, 128>}, {transform_indices = @transform_4, window_bounds = array<i64: 1, 16, 32>}]} {
    %c0 = arith.constant 0 : index
    %c0_0 = arith.constant 0 : index
    %c0_1 = arith.constant 0 : index
    %0 = vector.load %arg1[%c0, %c0_0, %c0_1] : memref<1x16x32xf32, #tpu.memory_space<vmem>>, vector<1x16x32xf32>
    %1 = vector.shape_cast %0 : vector<1x16x32xf32> to vector<16x32xf32>
    %c0_2 = arith.constant 0 : index
    %c0_3 = arith.constant 0 : index
    %c0_4 = arith.constant 0 : index
    %2 = vector.load %arg2[%c0_2, %c0_3, %c0_4] : memref<1x80x16xf32, #tpu.memory_space<vmem>>, vector<1x16x16xf32>
    %3 = vector.shape_cast %2 : vector<1x16x16xf32> to vector<16x16xf32>
    %4 = tpu.concatenate %3, %3, %3, %3 in 1 : vector<16x16xf32>, vector<16x16xf32>, vector<16x16xf32>, vector<16x16xf32> -> vector<16x64xf32>
    %c0_5 = arith.constant 0 : index
    %c16 = arith.constant 16 : index
    %c0_6 = arith.constant 0 : index
    %5 = vector.load %arg2[%c0_5, %c16, %c0_6] : memref<1x80x16xf32, #tpu.memory_space<vmem>>, vector<1x16x16xf32>
    %6 = vector.shape_cast %5 : vector<1x16x16xf32> to vector<16x16xf32>
    %7 = tpu.concatenate %6, %6, %6, %6 in 1 : vector<16x16xf32>, vector<16x16xf32>, vector<16x16xf32>, vector<16x16xf32> -> vector<16x64xf32>
    %c0_7 = arith.constant 0 : index
    %c32 = arith.constant 32 : index
    %c0_8 = arith.constant 0 : index
    %8 = vector.load %arg2[%c0_7, %c32, %c0_8] : memref<1x80x16xf32, #tpu.memory_space<vmem>>, vector<1x16x16xf32>
    %9 = vector.shape_cast %8 : vector<1x16x16xf32> to vector<16x16xf32>
    %10 = tpu.concatenate %9, %9, %9, %9 in 1 : vector<16x16xf32>, vector<16x16xf32>, vector<16x16xf32>, vector<16x16xf32> -> vector<16x64xf32>
    %c0_9 = arith.constant 0 : index
    %c48 = arith.constant 48 : index
    %c0_10 = arith.constant 0 : index
    %11 = vector.load %arg2[%c0_9, %c48, %c0_10] : memref<1x80x16xf32, #tpu.memory_space<vmem>>, vector<1x16x16xf32>
    %12 = vector.shape_cast %11 : vector<1x16x16xf32> to vector<16x16xf32>
    %13 = tpu.concatenate %12, %12, %12, %12 in 1 : vector<16x16xf32>, vector<16x16xf32>, vector<16x16xf32>, vector<16x16xf32> -> vector<16x64xf32>
    %c0_11 = arith.constant 0 : index
    %c64 = arith.constant 64 : index
    %c0_12 = arith.constant 0 : index
    %14 = vector.load %arg2[%c0_11, %c64, %c0_12] : memref<1x80x16xf32, #tpu.memory_space<vmem>>, vector<1x16x16xf32>
    %15 = vector.shape_cast %14 : vector<1x16x16xf32> to vector<16x16xf32>
    %16 = tpu.concatenate %15, %15, %15, %15 in 1 : vector<16x16xf32>, vector<16x16xf32>, vector<16x16xf32>, vector<16x16xf32> -> vector<16x64xf32>
    %c0_13 = arith.constant 0 : index
    %c0_14 = arith.constant 0 : index
    %17 = vector.load %arg3[%c0_13, %c0_14] : memref<624x32xf32, #tpu.memory_space<vmem>>, vector<64x32xf32>
    %c64_15 = arith.constant 64 : index
    %c0_16 = arith.constant 0 : index
    %18 = vector.load %arg3[%c64_15, %c0_16] : memref<624x32xf32, #tpu.memory_space<vmem>>, vector<1x32xf32>
    %c66 = arith.constant 66 : index
    %c0_17 = arith.constant 0 : index
    %19 = vector.load %arg3[%c66, %c0_17] : memref<624x32xf32, #tpu.memory_space<vmem>>, vector<1x32xf32>
    %cst = arith.constant dense<0.000000e+00> : vector<16xf32>
    %20 = vector.multi_reduction <add>, %1, %cst [1] : vector<16x32xf32> to vector<16xf32>
    %21 = vector.shape_cast %20 : vector<16xf32> to vector<16x1xf32>
    %cst_18 = arith.constant 3.200000e+01 : f32
    %22 = vector.broadcast %cst_18 : f32 to vector<16x1xf32>
    %23 = arith.divf %21, %22 : vector<16x1xf32>
    %24 = vector.broadcast %23 : vector<16x1xf32> to vector<16x32xf32>
    %25 = arith.subf %1, %24 : vector<16x32xf32>
    %26 = arith.mulf %25, %25 : vector<16x32xf32>
    %cst_19 = arith.constant dense<0.000000e+00> : vector<16xf32>
    %27 = vector.multi_reduction <add>, %26, %cst_19 [1] : vector<16x32xf32> to vector<16xf32>
    %28 = vector.shape_cast %27 : vector<16xf32> to vector<16x1xf32>
    %cst_20 = arith.constant 0.0322580636 : f32
    %29 = vector.broadcast %cst_20 : f32 to vector<16x1xf32>
    %30 = arith.mulf %28, %29 : vector<16x1xf32>
    %31 = math.sqrt %30 : vector<16x1xf32>
    %cst_21 = arith.constant 9.99999997E-7 : f32
    %32 = vector.broadcast %cst_21 : f32 to vector<16x1xf32>
    %33 = arith.addf %31, %32 : vector<16x1xf32>
    %34 = tpu.reciprocal %33 : vector<16x1xf32> -> vector<16x1xf32>
    %35 = vector.broadcast %34 : vector<16x1xf32> to vector<16x32xf32>
    %36 = arith.mulf %25, %35 : vector<16x32xf32>
    %37 = vector.broadcast %18 : vector<1x32xf32> to vector<16x32xf32>
    %38 = arith.mulf %37, %36 : vector<16x32xf32>
    %39 = vector.broadcast %19 : vector<1x32xf32> to vector<16x32xf32>
    %40 = arith.addf %38, %39 : vector<16x32xf32>
    %c0_22 = arith.constant 0 : index
    %c0_23 = arith.constant 0 : index
    %41 = vector.load %arg4[%c0_22, %c0_23] : memref<66x128xf32, #tpu.memory_space<vmem>>, vector<32x128xf32>
    %c64_24 = arith.constant 64 : index
    %c0_25 = arith.constant 0 : index
    %42 = vector.load %arg4[%c64_24, %c0_25] : memref<66x128xf32, #tpu.memory_space<vmem>>, vector<1x128xf32>
    %cst_26 = arith.constant dense<0.000000e+00> : vector<16x128xf32>
    %43 = tpu.matmul %40, %41, %cst_26 {dimension_numbers = #tpu.dot_dimension_numbers<[1], [0], [0], [1], [0, 0, 1, 1], [], []>} : vector<16x32xf32>, vector<32x128xf32>, vector<16x128xf32> -> vector<16x128xf32>
    %44 = vector.broadcast %42 : vector<1x128xf32> to vector<16x128xf32>
    %45 = arith.addf %43, %44 : vector<16x128xf32>
    %46 = vector.extract_strided_slice %45 {offsets = [0, 0], sizes = [16, 32], strides = [1, 1]} : vector<16x128xf32> to vector<16x32xf32>
    %47 = vector.extract_strided_slice %45 {offsets = [0, 32], sizes = [16, 32], strides = [1, 1]} : vector<16x128xf32> to vector<16x32xf32>
    %48 = vector.extract_strided_slice %45 {offsets = [0, 64], sizes = [16, 32], strides = [1, 1]} : vector<16x128xf32> to vector<16x32xf32>
    %49 = vector.extract_strided_slice %45 {offsets = [0, 96], sizes = [16, 32], strides = [1, 1]} : vector<16x128xf32> to vector<16x32xf32>
    %c112 = arith.constant 112 : index
    %c0_27 = arith.constant 0 : index
    %50 = vector.load %arg3[%c112, %c0_27] : memref<624x32xf32, #tpu.memory_space<vmem>>, vector<256x32xf32>
    %51 = tpu.concatenate %47, %47, %47, %47 in 0 : vector<16x32xf32>, vector<16x32xf32>, vector<16x32xf32>, vector<16x32xf32> -> vector<64x32xf32>
    %52 = arith.mulf %51, %17 : vector<64x32xf32>
    %cst_28 = arith.constant dense<0.000000e+00> : vector<16x64xf32>
    %53 = tpu.matmul %46, %52, %cst_28 {dimension_numbers = #tpu.dot_dimension_numbers<[1], [1], [0], [0], [0, 0, 1, 0], [], []>} : vector<16x32xf32>, vector<64x32xf32>, vector<16x64xf32> -> vector<16x64xf32>
    %54 = vector.extract_strided_slice %50 {offsets = [0, 0], sizes = [64, 32], strides = [1, 1]} : vector<256x32xf32> to vector<64x32xf32>
    %cst_29 = arith.constant dense<0.000000e+00> : vector<16x64xf32>
    %55 = tpu.matmul %46, %54, %cst_29 {dimension_numbers = #tpu.dot_dimension_numbers<[1], [1], [0], [0], [0, 0, 1, 0], [], []>} : vector<16x32xf32>, vector<64x32xf32>, vector<16x64xf32> -> vector<16x64xf32>
    %56 = arith.mulf %55, %7 : vector<16x64xf32>
    %57 = arith.addf %53, %56 : vector<16x64xf32>
    %58 = vector.extract_strided_slice %50 {offsets = [64, 0], sizes = [64, 32], strides = [1, 1]} : vector<256x32xf32> to vector<64x32xf32>
    %cst_30 = arith.constant dense<0.000000e+00> : vector<16x64xf32>
    %59 = tpu.matmul %46, %58, %cst_30 {dimension_numbers = #tpu.dot_dimension_numbers<[1], [1], [0], [0], [0, 0, 1, 0], [], []>} : vector<16x32xf32>, vector<64x32xf32>, vector<16x64xf32> -> vector<16x64xf32>
    %60 = arith.mulf %59, %10 : vector<16x64xf32>
    %61 = arith.addf %57, %60 : vector<16x64xf32>
    %62 = vector.extract_strided_slice %50 {offsets = [128, 0], sizes = [64, 32], strides = [1, 1]} : vector<256x32xf32> to vector<64x32xf32>
    %cst_31 = arith.constant dense<0.000000e+00> : vector<16x64xf32>
    %63 = tpu.matmul %46, %62, %cst_31 {dimension_numbers = #tpu.dot_dimension_numbers<[1], [1], [0], [0], [0, 0, 1, 0], [], []>} : vector<16x32xf32>, vector<64x32xf32>, vector<16x64xf32> -> vector<16x64xf32>
    %64 = arith.mulf %63, %13 : vector<16x64xf32>
    %65 = arith.addf %61, %64 : vector<16x64xf32>
    %66 = vector.extract_strided_slice %50 {offsets = [192, 0], sizes = [64, 32], strides = [1, 1]} : vector<256x32xf32> to vector<64x32xf32>
    %cst_32 = arith.constant dense<0.000000e+00> : vector<16x64xf32>
    %67 = tpu.matmul %46, %66, %cst_32 {dimension_numbers = #tpu.dot_dimension_numbers<[1], [1], [0], [0], [0, 0, 1, 0], [], []>} : vector<16x32xf32>, vector<64x32xf32>, vector<16x64xf32> -> vector<16x64xf32>
    %68 = arith.mulf %67, %16 : vector<16x64xf32>
    %69 = arith.addf %65, %68 : vector<16x64xf32>
    %cst_33 = arith.constant 5.000000e-01 : f32
    %70 = vector.broadcast %cst_33 : f32 to vector<16x64xf32>
    %71 = arith.cmpf ogt, %4, %70 : vector<16x64xf32>
    %cst_34 = arith.constant -1.000000e+30 : f32
    %72 = vector.broadcast %cst_34 : f32 to vector<16x64xf32>
    %73 = arith.select %71, %69, %72 : vector<16x64xi1>, vector<16x64xf32>
    %cst_35 = arith.constant dense<0xFF800000> : vector<16xf32>
    %74 = vector.multi_reduction <maximumf>, %73, %cst_35 [1] : vector<16x64xf32> to vector<16xf32>
    %75 = vector.shape_cast %74 : vector<16xf32> to vector<16x1xf32>
    %76 = vector.broadcast %75 : vector<16x1xf32> to vector<16x64xf32>
    %77 = arith.subf %73, %76 : vector<16x64xf32>
    %78 = math.exp %77 : vector<16x64xf32>
    %79 = arith.mulf %78, %4 : vector<16x64xf32>
    %cst_36 = arith.constant dense<0.000000e+00> : vector<16x32xf32>
    %80 = tpu.matmul %79, %17, %cst_36 {dimension_numbers = #tpu.dot_dimension_numbers<[1], [0], [0], [1], [0, 0, 1, 1], [], []>} : vector<16x64xf32>, vector<64x32xf32>, vector<16x32xf32> -> vector<16x32xf32>
    %cst_37 = arith.constant 1.000000e-30 : f32
    %81 = vector.broadcast %cst_37 : f32 to vector<16x32xf32>
    %82 = arith.maximumf %80, %81 : vector<16x32xf32>
    %83 = tpu.reciprocal %82 {approx = true} : vector<16x32xf32> -> vector<16x32xf32>
    %84 = tpu.concatenate %48, %48, %48, %48 in 0 : vector<16x32xf32>, vector<16x32xf32>, vector<16x32xf32>, vector<16x32xf32> -> vector<64x32xf32>
    %85 = arith.mulf %84, %17 : vector<64x32xf32>
    %cst_38 = arith.constant dense<0.000000e+00> : vector<16x32xf32>
    %86 = tpu.matmul %79, %85, %cst_38 {dimension_numbers = #tpu.dot_dimension_numbers<[1], [0], [0], [1], [0, 0, 1, 1], [], []>} : vector<16x64xf32>, vector<64x32xf32>, vector<16x32xf32> -> vector<16x32xf32>
    %87 = arith.mulf %79, %7 : vector<16x64xf32>
    %88 = arith.mulf %79, %10 : vector<16x64xf32>
    %89 = arith.mulf %79, %13 : vector<16x64xf32>
    %90 = arith.mulf %79, %16 : vector<16x64xf32>
    %91 = tpu.concatenate %87, %88, %89, %90 in 1 : vector<16x64xf32>, vector<16x64xf32>, vector<16x64xf32>, vector<16x64xf32> -> vector<16x256xf32>
    %cst_39 = arith.constant dense<0.000000e+00> : vector<16x32xf32>
    %92 = tpu.matmul %91, %50, %cst_39 {dimension_numbers = #tpu.dot_dimension_numbers<[1], [0], [0], [1], [0, 0, 1, 1], [], []>} : vector<16x256xf32>, vector<256x32xf32>, vector<16x32xf32> -> vector<16x32xf32>
    %93 = arith.addf %86, %92 : vector<16x32xf32>
    %94 = arith.mulf %93, %83 : vector<16x32xf32>
    %95 = arith.addf %1, %94 : vector<16x32xf32>
    %96 = arith.addf %95, %49 : vector<16x32xf32>
    %c65 = arith.constant 65 : index
    %c0_40 = arith.constant 0 : index
    %97 = vector.load %arg3[%c65, %c0_40] : memref<624x32xf32, #tpu.memory_space<vmem>>, vector<1x32xf32>
    %c67 = arith.constant 67 : index
    %c0_41 = arith.constant 0 : index
    %98 = vector.load %arg3[%c67, %c0_41] : memref<624x32xf32, #tpu.memory_space<vmem>>, vector<1x32xf32>
    %cst_42 = arith.constant dense<0.000000e+00> : vector<16xf32>
    %99 = vector.multi_reduction <add>, %96, %cst_42 [1] : vector<16x32xf32> to vector<16xf32>
    %100 = vector.shape_cast %99 : vector<16xf32> to vector<16x1xf32>
    %cst_43 = arith.constant 3.200000e+01 : f32
    %101 = vector.broadcast %cst_43 : f32 to vector<16x1xf32>
    %102 = arith.divf %100, %101 : vector<16x1xf32>
    %103 = vector.broadcast %102 : vector<16x1xf32> to vector<16x32xf32>
    %104 = arith.subf %96, %103 : vector<16x32xf32>
    %105 = arith.mulf %104, %104 : vector<16x32xf32>
    %cst_44 = arith.constant dense<0.000000e+00> : vector<16xf32>
    %106 = vector.multi_reduction <add>, %105, %cst_44 [1] : vector<16x32xf32> to vector<16xf32>
    %107 = vector.shape_cast %106 : vector<16xf32> to vector<16x1xf32>
    %cst_45 = arith.constant 0.0322580636 : f32
    %108 = vector.broadcast %cst_45 : f32 to vector<16x1xf32>
    %109 = arith.mulf %107, %108 : vector<16x1xf32>
    %110 = math.sqrt %109 : vector<16x1xf32>
    %cst_46 = arith.constant 9.99999997E-7 : f32
    %111 = vector.broadcast %cst_46 : f32 to vector<16x1xf32>
    %112 = arith.addf %110, %111 : vector<16x1xf32>
    %113 = tpu.reciprocal %112 : vector<16x1xf32> -> vector<16x1xf32>
    %114 = vector.broadcast %113 : vector<16x1xf32> to vector<16x32xf32>
    %115 = arith.mulf %104, %114 : vector<16x32xf32>
    %116 = vector.broadcast %97 : vector<1x32xf32> to vector<16x32xf32>
    %117 = arith.mulf %116, %115 : vector<16x32xf32>
    %118 = vector.broadcast %98 : vector<1x32xf32> to vector<16x32xf32>
    %119 = arith.addf %117, %118 : vector<16x32xf32>
    %c32_47 = arith.constant 32 : index
    %c0_48 = arith.constant 0 : index
    %120 = vector.load %arg4[%c32_47, %c0_48] : memref<66x128xf32, #tpu.memory_space<vmem>>, vector<32x128xf32>
    %c65_49 = arith.constant 65 : index
    %c0_50 = arith.constant 0 : index
    %121 = vector.load %arg4[%c65_49, %c0_50] : memref<66x128xf32, #tpu.memory_space<vmem>>, vector<1x128xf32>
    %cst_51 = arith.constant dense<0.000000e+00> : vector<16x128xf32>
    %122 = tpu.matmul %119, %120, %cst_51 {dimension_numbers = #tpu.dot_dimension_numbers<[1], [0], [0], [1], [0, 0, 1, 1], [], []>} : vector<16x32xf32>, vector<32x128xf32>, vector<16x128xf32> -> vector<16x128xf32>
    %123 = vector.broadcast %121 : vector<1x128xf32> to vector<16x128xf32>
    %124 = arith.addf %122, %123 : vector<16x128xf32>
    %125 = vector.extract_strided_slice %124 {offsets = [0, 0], sizes = [16, 32], strides = [1, 1]} : vector<16x128xf32> to vector<16x32xf32>
    %126 = vector.extract_strided_slice %124 {offsets = [0, 32], sizes = [16, 32], strides = [1, 1]} : vector<16x128xf32> to vector<16x32xf32>
    %127 = vector.extract_strided_slice %124 {offsets = [0, 64], sizes = [16, 32], strides = [1, 1]} : vector<16x128xf32> to vector<16x32xf32>
    %128 = vector.extract_strided_slice %124 {offsets = [0, 96], sizes = [16, 32], strides = [1, 1]} : vector<16x128xf32> to vector<16x32xf32>
    %c368 = arith.constant 368 : index
    %c0_52 = arith.constant 0 : index
    %129 = vector.load %arg3[%c368, %c0_52] : memref<624x32xf32, #tpu.memory_space<vmem>>, vector<256x32xf32>
    %130 = tpu.concatenate %126, %126, %126, %126 in 0 : vector<16x32xf32>, vector<16x32xf32>, vector<16x32xf32>, vector<16x32xf32> -> vector<64x32xf32>
    %131 = arith.mulf %130, %17 : vector<64x32xf32>
    %cst_53 = arith.constant dense<0.000000e+00> : vector<16x64xf32>
    %132 = tpu.matmul %125, %131, %cst_53 {dimension_numbers = #tpu.dot_dimension_numbers<[1], [1], [0], [0], [0, 0, 1, 0], [], []>} : vector<16x32xf32>, vector<64x32xf32>, vector<16x64xf32> -> vector<16x64xf32>
    %133 = vector.extract_strided_slice %129 {offsets = [0, 0], sizes = [64, 32], strides = [1, 1]} : vector<256x32xf32> to vector<64x32xf32>
    %cst_54 = arith.constant dense<0.000000e+00> : vector<16x64xf32>
    %134 = tpu.matmul %125, %133, %cst_54 {dimension_numbers = #tpu.dot_dimension_numbers<[1], [1], [0], [0], [0, 0, 1, 0], [], []>} : vector<16x32xf32>, vector<64x32xf32>, vector<16x64xf32> -> vector<16x64xf32>
    %135 = arith.mulf %134, %7 : vector<16x64xf32>
    %136 = arith.addf %132, %135 : vector<16x64xf32>
    %137 = vector.extract_strided_slice %129 {offsets = [64, 0], sizes = [64, 32], strides = [1, 1]} : vector<256x32xf32> to vector<64x32xf32>
    %cst_55 = arith.constant dense<0.000000e+00> : vector<16x64xf32>
    %138 = tpu.matmul %125, %137, %cst_55 {dimension_numbers = #tpu.dot_dimension_numbers<[1], [1], [0], [0], [0, 0, 1, 0], [], []>} : vector<16x32xf32>, vector<64x32xf32>, vector<16x64xf32> -> vector<16x64xf32>
    %139 = arith.mulf %138, %10 : vector<16x64xf32>
    %140 = arith.addf %136, %139 : vector<16x64xf32>
    %141 = vector.extract_strided_slice %129 {offsets = [128, 0], sizes = [64, 32], strides = [1, 1]} : vector<256x32xf32> to vector<64x32xf32>
    %cst_56 = arith.constant dense<0.000000e+00> : vector<16x64xf32>
    %142 = tpu.matmul %125, %141, %cst_56 {dimension_numbers = #tpu.dot_dimension_numbers<[1], [1], [0], [0], [0, 0, 1, 0], [], []>} : vector<16x32xf32>, vector<64x32xf32>, vector<16x64xf32> -> vector<16x64xf32>
    %143 = arith.mulf %142, %13 : vector<16x64xf32>
    %144 = arith.addf %140, %143 : vector<16x64xf32>
    %145 = vector.extract_strided_slice %129 {offsets = [192, 0], sizes = [64, 32], strides = [1, 1]} : vector<256x32xf32> to vector<64x32xf32>
    %cst_57 = arith.constant dense<0.000000e+00> : vector<16x64xf32>
    %146 = tpu.matmul %125, %145, %cst_57 {dimension_numbers = #tpu.dot_dimension_numbers<[1], [1], [0], [0], [0, 0, 1, 0], [], []>} : vector<16x32xf32>, vector<64x32xf32>, vector<16x64xf32> -> vector<16x64xf32>
    %147 = arith.mulf %146, %16 : vector<16x64xf32>
    %148 = arith.addf %144, %147 : vector<16x64xf32>
    %cst_58 = arith.constant 5.000000e-01 : f32
    %149 = vector.broadcast %cst_58 : f32 to vector<16x64xf32>
    %150 = arith.cmpf ogt, %4, %149 : vector<16x64xf32>
    %cst_59 = arith.constant -1.000000e+30 : f32
    %151 = vector.broadcast %cst_59 : f32 to vector<16x64xf32>
    %152 = arith.select %150, %148, %151 : vector<16x64xi1>, vector<16x64xf32>
    %cst_60 = arith.constant dense<0xFF800000> : vector<16xf32>
    %153 = vector.multi_reduction <maximumf>, %152, %cst_60 [1] : vector<16x64xf32> to vector<16xf32>
    %154 = vector.shape_cast %153 : vector<16xf32> to vector<16x1xf32>
    %155 = vector.broadcast %154 : vector<16x1xf32> to vector<16x64xf32>
    %156 = arith.subf %152, %155 : vector<16x64xf32>
    %157 = math.exp %156 : vector<16x64xf32>
    %158 = arith.mulf %157, %4 : vector<16x64xf32>
    %cst_61 = arith.constant dense<0.000000e+00> : vector<16x32xf32>
    %159 = tpu.matmul %158, %17, %cst_61 {dimension_numbers = #tpu.dot_dimension_numbers<[1], [0], [0], [1], [0, 0, 1, 1], [], []>} : vector<16x64xf32>, vector<64x32xf32>, vector<16x32xf32> -> vector<16x32xf32>
    %cst_62 = arith.constant 1.000000e-30 : f32
    %160 = vector.broadcast %cst_62 : f32 to vector<16x32xf32>
    %161 = arith.maximumf %159, %160 : vector<16x32xf32>
    %162 = tpu.reciprocal %161 {approx = true} : vector<16x32xf32> -> vector<16x32xf32>
    %163 = tpu.concatenate %127, %127, %127, %127 in 0 : vector<16x32xf32>, vector<16x32xf32>, vector<16x32xf32>, vector<16x32xf32> -> vector<64x32xf32>
    %164 = arith.mulf %163, %17 : vector<64x32xf32>
    %cst_63 = arith.constant dense<0.000000e+00> : vector<16x32xf32>
    %165 = tpu.matmul %158, %164, %cst_63 {dimension_numbers = #tpu.dot_dimension_numbers<[1], [0], [0], [1], [0, 0, 1, 1], [], []>} : vector<16x64xf32>, vector<64x32xf32>, vector<16x32xf32> -> vector<16x32xf32>
    %166 = arith.mulf %158, %7 : vector<16x64xf32>
    %167 = arith.mulf %158, %10 : vector<16x64xf32>
    %168 = arith.mulf %158, %13 : vector<16x64xf32>
    %169 = arith.mulf %158, %16 : vector<16x64xf32>
    %170 = tpu.concatenate %166, %167, %168, %169 in 1 : vector<16x64xf32>, vector<16x64xf32>, vector<16x64xf32>, vector<16x64xf32> -> vector<16x256xf32>
    %cst_64 = arith.constant dense<0.000000e+00> : vector<16x32xf32>
    %171 = tpu.matmul %170, %129, %cst_64 {dimension_numbers = #tpu.dot_dimension_numbers<[1], [0], [0], [1], [0, 0, 1, 1], [], []>} : vector<16x256xf32>, vector<256x32xf32>, vector<16x32xf32> -> vector<16x32xf32>
    %172 = arith.addf %165, %171 : vector<16x32xf32>
    %173 = arith.mulf %172, %162 : vector<16x32xf32>
    %174 = arith.addf %96, %173 : vector<16x32xf32>
    %175 = arith.addf %174, %128 : vector<16x32xf32>
    %c72 = arith.constant 72 : index
    %c0_65 = arith.constant 0 : index
    %176 = vector.load %arg3[%c72, %c0_65] : memref<624x32xf32, #tpu.memory_space<vmem>>, vector<32x32xf32>
    %c104 = arith.constant 104 : index
    %c0_66 = arith.constant 0 : index
    %177 = vector.load %arg3[%c104, %c0_66] : memref<624x32xf32, #tpu.memory_space<vmem>>, vector<1x32xf32>
    %cst_67 = arith.constant dense<0.000000e+00> : vector<16x32xf32>
    %178 = tpu.matmul %175, %176, %cst_67 {dimension_numbers = #tpu.dot_dimension_numbers<[1], [0], [0], [1], [0, 0, 1, 1], [], []>} : vector<16x32xf32>, vector<32x32xf32>, vector<16x32xf32> -> vector<16x32xf32>
    %179 = vector.broadcast %177 : vector<1x32xf32> to vector<16x32xf32>
    %180 = arith.addf %178, %179 : vector<16x32xf32>
    %c0_68 = arith.constant 0 : index
    %c0_69 = arith.constant 0 : index
    %c0_70 = arith.constant 0 : index
    %181 = vector.load %arg5[%c0_68, %c0_69, %c0_70] : memref<1x16x32xf32, #tpu.memory_space<vmem>>, vector<1x16x32xf32>
    %182 = vector.shape_cast %181 : vector<1x16x32xf32> to vector<16x32xf32>
    %183 = vector.shape_cast %180 : vector<16x32xf32> to vector<1x16x32xf32>
    tpu.vector_store %arg5[%c0_68, %c0_69, %c0_70], %183 {strides = array<i32>} : memref<1x16x32xf32, #tpu.memory_space<vmem>>, vector<1x16x32xf32>,
    return
  }
  func.func @transform_0(%arg0: i32) -> (i32, i32, i32) {
    %c0_i32 = arith.constant 0 : i32
    %c0_i32_0 = arith.constant 0 : i32
    %c0_i32_1 = arith.constant 0 : i32
    return %arg0, %c0_i32, %c0_i32_0 : i32, i32, i32
  }
  func.func @transform_1(%arg0: i32) -> (i32, i32, i32) {
    %c0_i32 = arith.constant 0 : i32
    %c0_i32_0 = arith.constant 0 : i32
    %c0_i32_1 = arith.constant 0 : i32
    return %arg0, %c0_i32, %c0_i32_0 : i32, i32, i32
  }
  func.func @transform_2(%arg0: i32) -> (i32, i32) {
    %c0_i32 = arith.constant 0 : i32
    %c0_i32_0 = arith.constant 0 : i32
    %c0_i32_1 = arith.constant 0 : i32
    return %c0_i32, %c0_i32_0 : i32, i32
  }
  func.func @transform_3(%arg0: i32) -> (i32, i32) {
    %c0_i32 = arith.constant 0 : i32
    %c0_i32_0 = arith.constant 0 : i32
    %c0_i32_1 = arith.constant 0 : i32
    return %c0_i32, %c0_i32_0 : i32, i32
  }
  func.func @transform_4(%arg0: i32) -> (i32, i32, i32) {
    %c0_i32 = arith.constant 0 : i32
    %c0_i32_0 = arith.constant 0 : i32
    %c0_i32_1 = arith.constant 0 : i32
    return %arg0, %c0_i32, %c0_i32_0 : i32, i32, i32
  }
}

</mosaic_0001>

<llo_original>
// kernel: nmr_graph_encoder.1
$region0: #{nmr_graph_encoder.1}
  #allocation0 [shape = 'u32[]', space=smem, size = 0x4, offset = 0x4, fixed_abs, tag = 'smem constant byte address 0x4 - core index']
  #allocation1 [shape = 'u32[144,128]{1,0:T(1,128)}', space=vmem, size = 0x12000, scoped, tag = 'internal scratch']
  %s0 = inlined_call_operand.vmem [shape: f32[8,16,32], index: 0, kind: input, shape index: {}]
  %s1 = inlined_call_operand.vmem [shape: f32[8,80,16], index: 1, kind: input, shape index: {}]
  %s2 = inlined_call_operand.vmem [shape: f32[624,32], index: 2, kind: input, shape index: {}]
  %s3 = inlined_call_operand.vmem [shape: f32[66,128], index: 3, kind: input, shape index: {}]
  %s4 = inlined_call_operand.hbm [shape: f32[8,16,32], index: 4, kind: output, shape index: {}]
  %s5 = sld [smem:[#allocation0]]
  $region49: #{nmr_graph_encoder.1} parent=0
    _
  %s7 = ssub.s32 1, %s5
  %s8 = scalar_select 0, %s7, %s5
  $region1: #{nmr_graph_encoder.1} parent=0
    #allocation2 [shape = 'u8[16384]{0}', space=vmem, size = 0x4000, scoped, tag = 'output window, operand 0']
    #allocation3 [shape = 's32[2]{0}', space=sflag, size = 0x8, scoped, tag = 'scoped memory for nmr_graph_encoder.1']
    %9 = vsyncpa [#allocation3], 0
    %s10 = scalar_lea.sflag [#allocation3], 1
    %11 = vsyncpa %s10, 0
    loop: start=0, step=1, limit=10
    $region2: #{nmr_graph_encoder.1} parent=1 // loop_pre_header
      _
    $region3: #{nmr_graph_encoder.1} parent=1 // loop_header
      %s13 = sphi 0, %s17
      %p14 = scmp.ge.s32.totalorder %s13, 10
      %s23 = sphi 0, %s25
      %s26 = sphi 0, %s23
      %s27 = sphi 0, %s26
      %s43 = sphi 0, %s27
      %s49 = sphi 0, %s51
      %s52 = sphi 0, %s49
      %s53 = sphi 0, %s52
      %s69 = sphi 0, %s53
      %s73 = sphi 0, %s73
      %s75 = sphi 0, %s73
      %s76 = sphi 0, %s75
      %s90 = sphi 0, %s76
      %s94 = sphi 0, %s94
      %s96 = sphi 0, %s94
      %s97 = sphi 0, %s96
      %s111 = sphi 0, %s97
      %s117 = sphi 0, %s119
      %s120 = sphi 0, %s117
      %s121 = sphi 0, %s120
      %s137 = sphi 0, %s121
    $region4: #{nmr_graph_encoder.1} parent=1 // loop_header_branch
      %16 = sbr.rel (%p14) target = $region8
    $region5: #{nmr_graph_encoder.1} parent=1 // loop_body
      %s18 = ssub.s32 %s13, 1
      %s19 = ssub.s32 %s13, 2
      %s20 = sadd.s32 %s13, 1
      %s21 = ssub.s32 %s13, %s20
      %p22 = scmp.eq.s32.totalorder %s21, 0
      %s24 = sadd.s32 %s23, 1
      %s25 = scalar_select %p22, %s23, %s24
      %p28 = pneg %p22
      %p29 = scmp.eq.s32.totalorder %s13, 7
      %p30 = por %p28, %p29
      %p31 = scmp.ne.s32.totalorder %s23, %s26
      %p32 = scmp.eq.s32.totalorder %s13, 0
      %p33 = por %p31, %p32
      %p34 = scmp.ne.s32.totalorder %s23, %s26
      %p35 = scmp.eq.s32.totalorder %s18, 7
      %p36 = por %p34, %p35
      %p37 = scmp.ne.s32.totalorder %s26, %s27
      %p38 = scmp.eq.s32.totalorder %s18, 0
      %p39 = por %p37, %p38
      %p40 = scmp.ne.s32.totalorder %s26, %s27
      %p41 = scmp.eq.s32.totalorder %s19, 7
      %p42 = por %p40, %p41
      %p44 = scmp.ne.s32.totalorder %s27, %s43
      %p45 = scmp.eq.s32.totalorder %s19, 0
      %p46 = por %p44, %p45
      %s47 = ssub.s32 %s13, %s20
      %p48 = scmp.eq.s32.totalorder %s47, 0
      %s50 = sadd.s32 %s49, 1
      %s51 = scalar_select %p48, %s49, %s50
      %p54 = pneg %p48
      %p55 = scmp.eq.s32.totalorder %s13, 7
      %p56 = por %p54, %p55
      %p57 = scmp.ne.s32.totalorder %s49, %s52
      %p58 = scmp.eq.s32.totalorder %s13, 0
      %p59 = por %p57, %p58
      %p60 = scmp.ne.s32.totalorder %s49, %s52
      %p61 = scmp.eq.s32.totalorder %s18, 7
      %p62 = por %p60, %p61
      %p63 = scmp.ne.s32.totalorder %s52, %s53
      %p64 = scmp.eq.s32.totalorder %s18, 0
      %p65 = por %p63, %p64
      %p66 = scmp.ne.s32.totalorder %s52, %s53
      %p67 = scmp.eq.s32.totalorder %s19, 7
      %p68 = por %p66, %p67
      %p70 = scmp.ne.s32.totalorder %s53, %s69
      %p71 = scmp.eq.s32.totalorder %s19, 0
      %p72 = por %p70, %p71
      %s74 = sadd.s32 %s73, 1
      %p77 = scmp.eq.s32.totalorder %s13, 7
      %p78 = scmp.ne.s32.totalorder %s73, %s75
      %p79 = scmp.eq.s32.totalorder %s13, 0
      %p80 = por %p78, %p79
      %p81 = scmp.ne.s32.totalorder %s73, %s75
      %p82 = scmp.eq.s32.totalorder %s18, 7
      %p83 = por %p81, %p82
      %p84 = scmp.ne.s32.totalorder %s75, %s76
      %p85 = scmp.eq.s32.totalorder %s18, 0
      %p86 = por %p84, %p85
      %p87 = scmp.ne.s32.totalorder %s75, %s76
      %p88 = scmp.eq.s32.totalorder %s19, 7
      %p89 = por %p87, %p88
      %p91 = scmp.ne.s32.totalorder %s76, %s90
      %p92 = scmp.eq.s32.totalorder %s19, 0
      %p93 = por %p91, %p92
      %s95 = sadd.s32 %s94, 1
      %p98 = scmp.eq.s32.totalorder %s13, 7
      %p99 = scmp.ne.s32.totalorder %s94, %s96
      %p100 = scmp.eq.s32.totalorder %s13, 0
      %p101 = por %p99, %p100
      %p102 = scmp.ne.s32.totalorder %s94, %s96
      %p103 = scmp.eq.s32.totalorder %s18, 7
      %p104 = por %p102, %p103
      %p105 = scmp.ne.s32.totalorder %s96, %s97
      %p106 = scmp.eq.s32.totalorder %s18, 0
      %p107 = por %p105, %p106
      %p108 = scmp.ne.s32.totalorder %s96, %s97
      %p109 = scmp.eq.s32.totalorder %s19, 7
      %p110 = por %p108, %p109
      %p112 = scmp.ne.s32.totalorder %s97, %s111
      %p113 = scmp.eq.s32.totalorder %s19, 0
      %p114 = por %p112, %p113
      %s115 = ssub.s32 %s13, %s20
      %p116 = scmp.eq.s32.totalorder %s115, 0
      %s118 = sadd.s32 %s117, 1
      %s119 = scalar_select %p116, %s117, %s118
      %p122 = pneg %p116
      %p123 = scmp.eq.s32.totalorder %s13, 7
      %p124 = por %p122, %p123
      %p125 = scmp.ne.s32.totalorder %s117, %s120
      %p126 = scmp.eq.s32.totalorder %s13, 0
      %p127 = por %p125, %p126
      %p128 = scmp.ne.s32.totalorder %s117, %s120
      %p129 = scmp.eq.s32.totalorder %s18, 7
      %p130 = por %p128, %p129
      %p131 = scmp.ne.s32.totalorder %s120, %s121
      %p132 = scmp.eq.s32.totalorder %s18, 0
      %p133 = por %p131, %p132
      %p134 = scmp.ne.s32.totalorder %s120, %s121
      %p135 = scmp.eq.s32.totalorder %s19, 7
      %p136 = por %p134, %p135
      %p138 = scmp.ne.s32.totalorder %s121, %s137
      %p139 = scmp.eq.s32.totalorder %s19, 0
      %p140 = por %p138, %p139
      %p141 = scmp.le.s32.totalorder 1, %s13
      %p142 = scmp.lt.s32.totalorder %s13, 9
      %p143 = pnand %p141, %p142
      %p144 = pneg %p143
      // Predicated region
      $region9: #{nmr_graph_encoder.1} parent=5 // pred_check
        _
      $region10: #{nmr_graph_encoder.1} parent=5 // pred_check_branch
        %146 = sbr.rel (%p143) target = $region12
      $region11: #{nmr_graph_encoder.1} parent=5 // pred_region
        %s147 = ssub.s32 %s13, 1
        // Predicated region
        $region13: #{nmr_graph_encoder.1} parent=11 // pred_check
          %p148 = pneg %p86
        $region14: #{nmr_graph_encoder.1} parent=11 // pred_check_branch
          %150 = sbr.rel (%p148) target = $region16
        $region15: #{nmr_graph_encoder.1} parent=11 // pred_region
          _
        $region16: #{nmr_graph_encoder.1} parent=11 // pred_fallthru
          _
        // Predicated region
        $region17: #{nmr_graph_encoder.1} parent=11 // pred_check
          %p151 = pneg %p107
        $region18: #{nmr_graph_encoder.1} parent=11 // pred_check_branch
          %153 = sbr.rel (%p151) target = $region20
        $region19: #{nmr_graph_encoder.1} parent=11 // pred_region
          _
        $region20: #{nmr_graph_encoder.1} parent=11 // pred_fallthru
          _
      $region12: #{nmr_graph_encoder.1} parent=5 // pred_fallthru
        _
      %p154 = scmp.lt.s32.totalorder %s13, 8
      // Predicated region
      $region21: #{nmr_graph_encoder.1} parent=5 // pred_check
        %p155 = pneg %p154
      $region22: #{nmr_graph_encoder.1} parent=5 // pred_check_branch
        %157 = sbr.rel (%p155) target = $region24
      $region23: #{nmr_graph_encoder.1} parent=5 // pred_region
        // Predicated region
        $region25: #{nmr_graph_encoder.1} parent=23 // pred_check
          %p158 = pneg %p33
        $region26: #{nmr_graph_encoder.1} parent=23 // pred_check_branch
          %160 = sbr.rel (%p158) target = $region28
        $region27: #{nmr_graph_encoder.1} parent=23 // pred_region
          %p161 = scmp.lt.s32.totalorder %s13, 7
          %s162 = scalar_select %p161, %s13, 7
          %s163 = smul.addr %s162, 2
          %s164 = smul.addr %s163, 8
          %s165 = scalar_lea.vmem %s0, %s164
        $region28: #{nmr_graph_encoder.1} parent=23 // pred_fallthru
          _
        // Predicated region
        $region29: #{nmr_graph_encoder.1} parent=23 // pred_check
          %p166 = pneg %p59
        $region30: #{nmr_graph_encoder.1} parent=23 // pred_check_branch
          %168 = sbr.rel (%p166) target = $region32
        $region31: #{nmr_graph_encoder.1} parent=23 // pred_region
          %p169 = scmp.lt.s32.totalorder %s13, 7
          %s170 = scalar_select %p169, %s13, 7
          %s171 = smul.addr %s170, 10
          %s172 = smul.addr %s171, 8
          %s173 = scalar_lea.vmem %s1, %s172
        $region32: #{nmr_graph_encoder.1} parent=23 // pred_fallthru
          _
      $region24: #{nmr_graph_encoder.1} parent=5 // pred_fallthru
        _
      %p174 = scmp.le.s32.totalorder 1, %s13
      %p175 = scmp.lt.s32.totalorder %s13, 9
      %p176 = pnand %p174, %p175
      %p177 = pneg %p176
      // Predicated region
      $region33: #{nmr_graph_encoder.1} parent=5 // pred_check
        _
      $region34: #{nmr_graph_encoder.1} parent=5 // pred_check_branch
        %179 = sbr.rel (%p176) target = $region36
      $region35: #{nmr_graph_encoder.1} parent=5 // pred_region
        %s180 = ssub.s32 %s13, 1
        %p181 = scmp.lt.s32.totalorder %s18, 7
        %s182 = scalar_select %p181, %s18, 7
        %s183 = smul.addr %s182, 2
        %s184 = smul.addr %s183, 8
        %s185 = scalar_lea.vmem %s0, %s184
        %p186 = pneg %p39
        %p187 = pneg %p36
        %p188 = scmp.lt.s32.totalorder %s18, 7
        %s189 = scalar_select %p188, %s18, 7
        %s190 = smul.addr %s189, 10
        %s191 = smul.addr %s190, 8
        %s192 = scalar_lea.vmem %s1, %s191
        %p193 = pneg %p65
        %p194 = pneg %p62
        %p195 = pneg %p86
        %p196 = pneg %p83
        %p197 = pneg %p107
        %p198 = pneg %p104
        %p199 = pneg %p133
        %p200 = pneg %p130
        %s201 = sand.u32 %s120, 1
        %s202 = scalar_lea.sflag [#allocation3], %s201
        %s203 = sand.u32 %s120, 1
        %s204 = smul.addr %s203, 16
        %s205 = scalar_lea.vmem [#allocation2], %s204
        %p206 = scmp.lt.s32.totalorder %s18, 7
        %s207 = scalar_select %p206, %s18, 7
        %s208 = smul.addr %s207, 2
        %s209 = smul.addr %s208, 8
        %s210 = scalar_lea.vmem %s0, %s209
        %p211 = scmp.lt.s32.totalorder %s18, 7
        %s212 = scalar_select %p211, %s18, 7
        %s213 = smul.addr %s212, 10
        %s214 = smul.addr %s213, 8
        %s215 = scalar_lea.vmem %s1, %s214
        %v216 = vld [vmem:[%s210] sm:$0xff]
        %v217 = vld [vmem:[%s210 + $0x8] sm:$0xff]
        %v218 = vld [vmem:[%s215] sm:$0xff]
        %v219 = vld [vmem:[%s215 + $0x8] sm:$0xff]
        %222 = vrot.lane.b32.xlu0 %v218, 16
        %v223 = vpop.permute.xlu0 %222
        %224 = vrot.lane.b32.xlu0 %v219, 16
        %v225 = vpop.permute.xlu0 %224
        %228 = vrot.lane.b32.xlu0 %v218, 32
        %v229 = vpop.permute.xlu0 %228
        %230 = vrot.lane.b32.xlu0 %v219, 32
        %v231 = vpop.permute.xlu0 %230
        %234 = vrot.lane.b32.xlu0 %v218, 48
        %v235 = vpop.permute.xlu0 %234
        %236 = vrot.lane.b32.xlu0 %v219, 48
        %v237 = vpop.permute.xlu0 %236
        %vm240 = vcmask 130048
        %v241 = vsel %vm240, %v218, %v223
        %v242 = vsel %vm240, %v219, %v225
        %vm243 = vcmask 261120
        %v244 = vsel %vm243, %v241, %v229
        %v245 = vsel %vm243, %v242, %v231
        %vm246 = vcmask 392192
        %v247 = vsel %vm246, %v244, %v235
        %v248 = vsel %vm246, %v245, %v237
        %v249 = vld [vmem:[%s215 + $0x10] sm:$0xff]
        %v250 = vld [vmem:[%s215 + $0x18] sm:$0xff]
        %253 = vrot.lane.b32.xlu0 %v249, 16
        %v254 = vpop.permute.xlu0 %253
        %255 = vrot.lane.b32.xlu0 %v250, 16
        %v256 = vpop.permute.xlu0 %255
        %259 = vrot.lane.b32.xlu0 %v249, 32
        %v260 = vpop.permute.xlu0 %259
        %261 = vrot.lane.b32.xlu0 %v250, 32
        %v262 = vpop.permute.xlu0 %261
        %265 = vrot.lane.b32.xlu0 %v249, 48
        %v266 = vpop.permute.xlu0 %265
        %267 = vrot.lane.b32.xlu0 %v250, 48
        %v268 = vpop.permute.xlu0 %267
        %v271 = vsel %vm240, %v249, %v254
        %v272 = vsel %vm240, %v250, %v256
        %v273 = vsel %vm243, %v271, %v260
        %v274 = vsel %vm243, %v272, %v262
        %v275 = vsel %vm246, %v273, %v266
        %v276 = vsel %vm246, %v274, %v268
        %v277 = vld [vmem:[%s215 + $0x20] sm:$0xff]
        %v278 = vld [vmem:[%s215 + $0x28] sm:$0xff]
        %281 = vrot.lane.b32.xlu0 %v277, 16
        %v282 = vpop.permute.xlu0 %281
        %283 = vrot.lane.b32.xlu0 %v278, 16
        %v284 = vpop.permute.xlu0 %283
        %287 = vrot.lane.b32.xlu0 %v277, 32
        %v288 = vpop.permute.xlu0 %287
        %289 = vrot.lane.b32.xlu0 %v278, 32
        %v290 = vpop.permute.xlu0 %289
        %293 = vrot.lane.b32.xlu0 %v277, 48
        %v294 = vpop.permute.xlu0 %293
        %295 = vrot.lane.b32.xlu0 %v278, 48
        %v296 = vpop.permute.xlu0 %295
        %v299 = vsel %vm240, %v277, %v282
        %v300 = vsel %vm240, %v278, %v284
        %v301 = vsel %vm243, %v299, %v288
        %v302 = vsel %vm243, %v300, %v290
        %v303 = vsel %vm246, %v301, %v294
        %v304 = vsel %vm246, %v302, %v296
        %v305 = vld [vmem:[%s215 + $0x30] sm:$0xff]
        %v306 = vld [vmem:[%s215 + $0x38] sm:$0xff]
        %309 = vrot.lane.b32.xlu0 %v305, 16
        %v310 = vpop.permute.xlu0 %309
        %311 = vrot.lane.b32.xlu0 %v306, 16
        %v312 = vpop.permute.xlu0 %311
        %315 = vrot.lane.b32.xlu0 %v305, 32
        %v316 = vpop.permute.xlu0 %315
        %317 = vrot.lane.b32.xlu0 %v306, 32
        %v318 = vpop.permute.xlu0 %317
        %321 = vrot.lane.b32.xlu0 %v305, 48
        %v322 = vpop.permute.xlu0 %321
        %323 = vrot.lane.b32.xlu0 %v306, 48
        %v324 = vpop.permute.xlu0 %323
        %v327 = vsel %vm240, %v305, %v310
        %v328 = vsel %vm240, %v306, %v312
        %v329 = vsel %vm243, %v327, %v316
        %v330 = vsel %vm243, %v328, %v318
        %v331 = vsel %vm246, %v329, %v322
        %v332 = vsel %vm246, %v330, %v324
        %v333 = vld [vmem:[%s215 + $0x40] sm:$0xff]
        %v334 = vld [vmem:[%s215 + $0x48] sm:$0xff]
        %337 = vrot.lane.b32.xlu0 %v333, 16
        %v338 = vpop.permute.xlu0 %337
        %339 = vrot.lane.b32.xlu0 %v334, 16
        %v340 = vpop.permute.xlu0 %339
        %343 = vrot.lane.b32.xlu0 %v333, 32
        %v344 = vpop.permute.xlu0 %343
        %345 = vrot.lane.b32.xlu0 %v334, 32
        %v346 = vpop.permute.xlu0 %345
        %349 = vrot.lane.b32.xlu0 %v333, 48
        %v350 = vpop.permute.xlu0 %349
        %351 = vrot.lane.b32.xlu0 %v334, 48
        %v352 = vpop.permute.xlu0 %351
        %v355 = vsel %vm240, %v333, %v338
        %v356 = vsel %vm240, %v334, %v340
        %v357 = vsel %vm243, %v355, %v344
        %v358 = vsel %vm243, %v356, %v346
        %v359 = vsel %vm246, %v357, %v350
        %v360 = vsel %vm246, %v358, %v352
        %v361 = vld [vmem:[%s2] sm:$0xff]
        %v362 = vld [vmem:[%s2 + $0x8] sm:$0xff]
        %v363 = vld [vmem:[%s2 + $0x10] sm:$0xff]
        %v364 = vld [vmem:[%s2 + $0x18] sm:$0xff]
        %v365 = vld [vmem:[%s2 + $0x20] sm:$0xff]
        %v366 = vld [vmem:[%s2 + $0x28] sm:$0xff]
        %v367 = vld [vmem:[%s2 + $0x30] sm:$0xff]
        %v368 = vld [vmem:[%s2 + $0x38] sm:$0xff]
        %v369 = vld [vmem:[%s2 + $0x40] sm:$0x1]
        %v370 = vld [vmem:[%s2 + $0x42] sm:$0x1]
        %v371 = vsel %vm243, %v216, 0.0
        %372 = vadd.xlane.f32.xlu0 %v371
        %v373 = vpop.xlane.xlu0 %372
        %v374 = vsel %vm243, %v217, 0.0
        %375 = vadd.xlane.f32.xlu0 %v374
        %v376 = vpop.xlane.xlu0 %375
        %v377 = vrcp.pop 32.0
        %v378 = vmul.f32 %v373, %v377
        %v379 = vmul.f32 %v376, %v377
        %v380 = vsub.f32 %v216, %v378
        %v381 = vsub.f32 %v217, %v379
        %v382 = vmul.f32 %v380, %v380
        %v383 = vmul.f32 %v381, %v381
        %v384 = vsel %vm243, %v382, 0.0
        %385 = vadd.xlane.f32.xlu0 %v384
        %v386 = vpop.xlane.xlu0 %385
        %v387 = vsel %vm243, %v383, 0.0
        %388 = vadd.xlane.f32.xlu0 %v387
        %v389 = vpop.xlane.xlu0 %388
        %v390 = vmul.f32 %v386, 0.032258064
        %v391 = vmul.f32 %v389, 0.032258064
        %v392 = vrsqrt.pop %v390
        %v393 = vmul.f32 %v390, %v392
        %vm394 = vcmp.eq.f32.partialorder %v390, inf
        %v395 = vsel %vm394, %v390, %v393
        %vm396 = vcmp.eq.f32.partialorder %v390, 0.0
        %v397 = vand.u32 %v390, 2147483648
        %v398 = vsel %vm396, %v397, %v395
        %v399 = vrsqrt.pop %v391
        %v400 = vmul.f32 %v391, %v399
        %vm401 = vcmp.eq.f32.partialorder %v391, inf
        %v402 = vsel %vm401, %v391, %v400
        %vm403 = vcmp.eq.f32.partialorder %v391, 0.0
        %v404 = vand.u32 %v391, 2147483648
        %v405 = vsel %vm403, %v404, %v402
        %v406 = vadd.f32 %v398, 1e-06
        %v407 = vadd.f32 %v405, 1e-06
        %v408 = vrcp.pop %v406
        %v409 = vrcp.pop %v407
        %v410 = vmul.f32 %v380, %v408
        %v411 = vmul.f32 %v381, %v409
        %v412 = vlaneseq
        %v413 = vshrl.u32 %v412, 7
        %v414 = vsub.s32 0, %v413
        %v415 = vrot.slane %v369, %v414
        %v416 = vmul.f32 %v415, %v410
        %v417 = vmul.f32 %v415, %v411
        %v418 = vlaneseq
        %v419 = vshrl.u32 %v418, 7
        %v420 = vsub.s32 0, %v419
        %v421 = vrot.slane %v370, %v420
        %v422 = vadd.f32 %v416, %v421
        %v423 = vadd.f32 %v417, %v421
        %v424 = vld [vmem:[%s3] sm:$0xff]
        %v425 = vld [vmem:[%s3 + $0x8] sm:$0xff]
        %v426 = vld [vmem:[%s3 + $0x10] sm:$0xff]
        %v427 = vld [vmem:[%s3 + $0x18] sm:$0xff]
        %v428 = vld [vmem:[%s3 + $0x40] sm:$0x1]
        %v429 = vlaneseq
        %v430 = vshrl.u32 %v429, 7
        %v431 = vsub.s32 0, %v430
        %v432 = vrot.slane %v428, %v431
        %v434 = vsel %vm243, %v422, 0
        %v437 = vsel %vm243, %v423, 0
        %439 = vmatprep.subr.mxu0 0.0
        %440 = vmatpush1.msra.mxu0 0.0
        %441 = vmatprep.subr.mxu0 0.0
        %442 = vmatpush1.msra.mxu0 0.0
        %443 = vmatprep.subr.mxu0 0.0
        %444 = vmatpush1.msra.mxu0 0.0
        %445 = vmatprep.subr.mxu0 0.0
        %446 = vmatpush1.msra.mxu0 0.0
        %447 = vmatprep.subr.mxu0 0.0
        %448 = vmatpush1.msra.mxu0 0.0
        %449 = vmatprep.subr.mxu0 0.0
        %450 = vmatpush1.msra.mxu0 0.0
        %451 = vmatprep.subr.mxu0 0.0
        %452 = vmatpush1.msra.mxu0 0.0
        %453 = vmatprep.subr.mxu0 0.0
        %454 = vmatpush1.msra.mxu0 0.0
        %455 = vmatprep.subr.mxu0 0.0
        %456 = vmatpush1.msra.mxu0 0.0
        %457 = vmatprep.subr.mxu0 0.0
        %458 = vmatpush1.msra.mxu0 0.0
        %459 = vmatprep.subr.mxu0 0.0
        %460 = vmatpush1.msra.mxu0 0.0
        %461 = vmatprep.subr.mxu0 0.0
        %462 = vmatpush1.msra.mxu0 0.0
        %463 = vmatprep.subr.mxu0 0.0
        %464 = vmatpush1.msra.mxu0 %v427
        %465 = vmatprep.subr.mxu0 0.0
        %466 = vmatpush1.msra.mxu0 %v426
        %467 = vmatprep.subr.mxu0 0.0
        %468 = vmatpush1.msra.mxu0 %v425
        %469 = vmatprep.subr.mxu0 0.0
        %470 = vmatpush1.msra.mxu0 %v424
        %471 = vmatprep.subr.mxu0 0.0
        %472 = vmatpush2.msra.mxu0 0.0
        %473 = vmatprep.subr.mxu0 0.0
        %474 = vmatpush2.msra.mxu0 0.0
        %475 = vmatprep.subr.mxu0 0.0
        %476 = vmatpush2.msra.mxu0 0.0
        %477 = vmatprep.subr.mxu0 0.0
        %478 = vmatpush2.msra.mxu0 0.0
        %479 = vmatprep.subr.mxu0 0.0
        %480 = vmatpush2.msra.mxu0 0.0
        %481 = vmatprep.subr.mxu0 0.0
        %482 = vmatpush2.msra.mxu0 0.0
        %483 = vmatprep.subr.mxu0 0.0
        %484 = vmatpush2.msra.mxu0 0.0
        %485 = vmatprep.subr.mxu0 0.0
        %486 = vmatpush2.msra.mxu0 0.0
        %487 = vmatprep.subr.mxu0 0.0
        %488 = vmatpush2.msra.mxu0 0.0
        %489 = vmatprep.subr.mxu0 0.0
        %490 = vmatpush2.msra.mxu0 0.0
        %491 = vmatprep.subr.mxu0 0.0
        %492 = vmatpush2.msra.mxu0 0.0
        %493 = vmatprep.subr.mxu0 0.0
        %494 = vmatpush2.msra.mxu0 0.0
        %495 = vmatprep.subr.mxu0 0.0
        %496 = vmatpush2.msra.mxu0 0.0
        %497 = vmatprep.subr.mxu0 0.0
        %498 = vmatpush2.msra.mxu0 0.0
        %499 = vmatprep.subr.mxu0 0.0
        %500 = vmatpush2.msra.mxu0 0.0
        %501 = vmatprep.subr.mxu0 0.0
        %502 = vmatpush2.msra.mxu0 0.0
        %503 = vmatprep.mubr.f32.mxu0 0.0
        %504 = vmatmul.mubr.f32.gmra.mxu0 %v434
        %v505 = vpop.f32.mrf.mxu0
        %v506 = vadd.f32 %v432, %v505
        %v507 = vpop.f32.mrf.mxu0
        %508 = vmatprep.mubr.f32.mxu0 0.0
        %509 = vmatmul.mubr.f32.gmra.mxu0 %v437
        %v510 = vpop.f32.mrf.mxu0
        %v511 = vadd.f32 %v432, %v510
        %v512 = vpop.f32.mrf.mxu0
        %513 = vdwg.mxu0
        %v514 = vld [vmem:[%s2 + $0x70] sm:$0xff]
        %v515 = vld [vmem:[%s2 + $0x78] sm:$0xff]
        %v516 = vld [vmem:[%s2 + $0x80] sm:$0xff]
        %v517 = vld [vmem:[%s2 + $0x88] sm:$0xff]
        %v518 = vld [vmem:[%s2 + $0x90] sm:$0xff]
        %v519 = vld [vmem:[%s2 + $0x98] sm:$0xff]
        %v520 = vld [vmem:[%s2 + $0xa0] sm:$0xff]
        %v521 = vld [vmem:[%s2 + $0xa8] sm:$0xff]
        %v522 = vld [vmem:[%s2 + $0xb0] sm:$0xff]
        %v523 = vld [vmem:[%s2 + $0xb8] sm:$0xff]
        %v524 = vld [vmem:[%s2 + $0xc0] sm:$0xff]
        %v525 = vld [vmem:[%s2 + $0xc8] sm:$0xff]
        %v526 = vld [vmem:[%s2 + $0xd0] sm:$0xff]
        %v527 = vld [vmem:[%s2 + $0xd8] sm:$0xff]
        %v528 = vld [vmem:[%s2 + $0xe0] sm:$0xff]
        %v529 = vld [vmem:[%s2 + $0xe8] sm:$0xff]
        %v530 = vld [vmem:[%s2 + $0xf0] sm:$0xff]
        %v531 = vld [vmem:[%s2 + $0xf8] sm:$0xff]
        %v532 = vld [vmem:[%s2 + $0x100] sm:$0xff]
        %v533 = vld [vmem:[%s2 + $0x108] sm:$0xff]
        %v534 = vld [vmem:[%s2 + $0x110] sm:$0xff]
        %v535 = vld [vmem:[%s2 + $0x118] sm:$0xff]
        %v536 = vld [vmem:[%s2 + $0x120] sm:$0xff]
        %v537 = vld [vmem:[%s2 + $0x128] sm:$0xff]
        %v538 = vld [vmem:[%s2 + $0x130] sm:$0xff]
        %v539 = vld [vmem:[%s2 + $0x138] sm:$0xff]
        %v540 = vld [vmem:[%s2 + $0x140] sm:$0xff]
        %v541 = vld [vmem:[%s2 + $0x148] sm:$0xff]
        %v542 = vld [vmem:[%s2 + $0x150] sm:$0xff]
        %v543 = vld [vmem:[%s2 + $0x158] sm:$0xff]
        %v544 = vld [vmem:[%s2 + $0x160] sm:$0xff]
        %v545 = vld [vmem:[%s2 + $0x168] sm:$0xff]
        %554 = vrot.lane.b32.xlu0 %v361, 32
        %v555 = vpop.permute.xlu0 %554
        %556 = vrot.lane.b32.xlu0 %v362, 32
        %v557 = vpop.permute.xlu0 %556
        %558 = vrot.lane.b32.xlu0 %v363, 32
        %v559 = vpop.permute.xlu0 %558
        %560 = vrot.lane.b32.xlu0 %v364, 32
        %v561 = vpop.permute.xlu0 %560
        %562 = vrot.lane.b32.xlu0 %v365, 32
        %v563 = vpop.permute.xlu0 %562
        %564 = vrot.lane.b32.xlu0 %v366, 32
        %v565 = vpop.permute.xlu0 %564
        %566 = vrot.lane.b32.xlu0 %v367, 32
        %v567 = vpop.permute.xlu0 %566
        %568 = vrot.lane.b32.xlu0 %v368, 32
        %v569 = vpop.permute.xlu0 %568
        %v578 = vmul.f32 %v506, %v555
        %v579 = vmul.f32 %v511, %v557
        %v580 = vmul.f32 %v506, %v559
        %v581 = vmul.f32 %v511, %v561
        %v582 = vmul.f32 %v506, %v563
        %v583 = vmul.f32 %v511, %v565
        %v584 = vmul.f32 %v506, %v567
        %v585 = vmul.f32 %v511, %v569
        %v587 = vsel %vm243, %v506, 0
        %v590 = vsel %vm243, %v511, 0
        %v593 = vsel %vm243, %v514, 0
        %v596 = vsel %vm243, %v515, 0
        %v599 = vsel %vm243, %v516, 0
        %v602 = vsel %vm243, %v517, 0
        %v605 = vsel %vm243, %v518, 0
        %v608 = vsel %vm243, %v519, 0
        %v611 = vsel %vm243, %v520, 0
        %v614 = vsel %vm243, %v521, 0
        %616 = vmatprep.subr.mxu0 0.0
        %617 = vmatpush1.xpose.msra.mxu0 0.0
        %618 = vmatprep.subr.mxu0 0.0
        %619 = vmatpush1.xpose.msra.mxu0 0.0
        %620 = vmatprep.subr.mxu0 0.0
        %621 = vmatpush1.xpose.msra.mxu0 0.0
        %622 = vmatprep.subr.mxu0 0.0
        %623 = vmatpush1.xpose.msra.mxu0 0.0
        %624 = vmatprep.subr.mxu0 0.0
        %625 = vmatpush1.xpose.msra.mxu0 0.0
        %626 = vmatprep.subr.mxu0 0.0
        %627 = vmatpush1.xpose.msra.mxu0 0.0
        %628 = vmatprep.subr.mxu0 0.0
        %629 = vmatpush1.xpose.msra.mxu0 0.0
        %630 = vmatprep.subr.mxu0 0.0
        %631 = vmatpush1.xpose.msra.mxu0 0.0
        %632 = vmatprep.subr.mxu0 0.0
        %633 = vmatpush1.xpose.msra.mxu0 %v614
        %634 = vmatprep.subr.mxu0 0.0
        %635 = vmatpush1.xpose.msra.mxu0 %v611
        %636 = vmatprep.subr.mxu0 0.0
        %637 = vmatpush1.xpose.msra.mxu0 %v608
        %638 = vmatprep.subr.mxu0 0.0
        %639 = vmatpush1.xpose.msra.mxu0 %v605
        %640 = vmatprep.subr.mxu0 0.0
        %641 = vmatpush1.xpose.msra.mxu0 %v602
        %642 = vmatprep.subr.mxu0 0.0
        %643 = vmatpush1.xpose.msra.mxu0 %v599
        %644 = vmatprep.subr.mxu0 0.0
        %645 = vmatpush1.xpose.msra.mxu0 %v596
        %646 = vmatprep.subr.mxu0 0.0
        %647 = vmatpush1.xpose.msra.mxu0 %v593
        %648 = vmatprep.subr.mxu0 0.0
        %649 = vmatpush2.xpose.msra.mxu0 0.0
        %650 = vmatprep.subr.mxu0 0.0
        %651 = vmatpush2.xpose.msra.mxu0 0.0
        %652 = vmatprep.subr.mxu0 0.0
        %653 = vmatpush2.xpose.msra.mxu0 0.0
        %654 = vmatprep.subr.mxu0 0.0
        %655 = vmatpush2.xpose.msra.mxu0 0.0
        %656 = vmatprep.subr.mxu0 0.0
        %657 = vmatpush2.xpose.msra.mxu0 0.0
        %658 = vmatprep.subr.mxu0 0.0
        %659 = vmatpush2.xpose.msra.mxu0 0.0
        %660 = vmatprep.subr.mxu0 0.0
        %661 = vmatpush2.xpose.msra.mxu0 0.0
        %662 = vmatprep.subr.mxu0 0.0
        %663 = vmatpush2.xpose.msra.mxu0 0.0
        %664 = vmatprep.subr.mxu0 0.0
        %665 = vmatpush2.xpose.msra.mxu0 0.0
        %666 = vmatprep.subr.mxu0 0.0
        %667 = vmatpush2.xpose.msra.mxu0 0.0
        %668 = vmatprep.subr.mxu0 0.0
        %669 = vmatpush2.xpose.msra.mxu0 0.0
        %670 = vmatprep.subr.mxu0 0.0
        %671 = vmatpush2.xpose.msra.mxu0 0.0
        %672 = vmatprep.subr.mxu0 0.0
        %673 = vmatpush2.xpose.msra.mxu0 0.0
        %674 = vmatprep.subr.mxu0 0.0
        %675 = vmatpush2.xpose.msra.mxu0 0.0
        %676 = vmatprep.subr.mxu0 0.0
        %677 = vmatpush2.xpose.msra.mxu0 0.0
        %678 = vmatprep.subr.mxu0 0.0
        %679 = vmatpush2.xpose.msra.mxu0 0.0
        %680 = vmatprep.mubr.f32.mxu0 0.0
        %681 = vmatmul.mubr.f32.gmra.mxu0 %v587
        %v682 = vpop.f32.mrf.mxu0
        %v683 = vadd.f32 0.0, %v682
        %v684 = vpop.f32.mrf.mxu0
        %685 = vmatprep.mubr.f32.mxu0 0.0
        %686 = vmatmul.mubr.f32.gmra.mxu0 %v590
        %v687 = vpop.f32.mrf.mxu0
        %v688 = vadd.f32 0.0, %v687
        %v689 = vpop.f32.mrf.mxu0
        %690 = vdwg.mxu0
        %v691 = vmul.f32 %v683, %v275
        %v692 = vmul.f32 %v688, %v276
        %701 = vrot.lane.b32.xlu0 %v578, 96
        %v702 = vpop.permute.xlu0 %701
        %703 = vrot.lane.b32.xlu0 %v579, 96
        %v704 = vpop.permute.xlu0 %703
        %705 = vrot.lane.b32.xlu0 %v580, 96
        %v706 = vpop.permute.xlu0 %705
        %707 = vrot.lane.b32.xlu0 %v581, 96
        %v708 = vpop.permute.xlu0 %707
        %709 = vrot.lane.b32.xlu0 %v582, 96
        %v710 = vpop.permute.xlu0 %709
        %711 = vrot.lane.b32.xlu0 %v583, 96
        %v712 = vpop.permute.xlu0 %711
        %713 = vrot.lane.b32.xlu0 %v584, 96
        %v714 = vpop.permute.xlu0 %713
        %715 = vrot.lane.b32.xlu0 %v585, 96
        %v716 = vpop.permute.xlu0 %715
        %v717 = vsel %vm243, %v702, 0
        %v719 = vsel %vm243, %v704, 0
        %v721 = vsel %vm243, %v706, 0
        %v723 = vsel %vm243, %v708, 0
        %v725 = vsel %vm243, %v710, 0
        %v727 = vsel %vm243, %v712, 0
        %v729 = vsel %vm243, %v714, 0
        %v731 = vsel %vm243, %v716, 0
        %733 = vmatprep.subr.mxu0 0.0
        %734 = vmatpush1.xpose.msra.mxu0 0.0
        %735 = vmatprep.subr.mxu0 0.0
        %736 = vmatpush1.xpose.msra.mxu0 0.0
        %737 = vmatprep.subr.mxu0 0.0
        %738 = vmatpush1.xpose.msra.mxu0 0.0
        %739 = vmatprep.subr.mxu0 0.0
        %740 = vmatpush1.xpose.msra.mxu0 0.0
        %741 = vmatprep.subr.mxu0 0.0
        %742 = vmatpush1.xpose.msra.mxu0 0.0
        %743 = vmatprep.subr.mxu0 0.0
        %744 = vmatpush1.xpose.msra.mxu0 0.0
        %745 = vmatprep.subr.mxu0 0.0
        %746 = vmatpush1.xpose.msra.mxu0 0.0
        %747 = vmatprep.subr.mxu0 0.0
        %748 = vmatpush1.xpose.msra.mxu0 0.0
        %749 = vmatprep.subr.mxu0 0.0
        %750 = vmatpush1.xpose.msra.mxu0 %v731
        %751 = vmatprep.subr.mxu0 0.0
        %752 = vmatpush1.xpose.msra.mxu0 %v729
        %753 = vmatprep.subr.mxu0 0.0
        %754 = vmatpush1.xpose.msra.mxu0 %v727
        %755 = vmatprep.subr.mxu0 0.0
        %756 = vmatpush1.xpose.msra.mxu0 %v725
        %757 = vmatprep.subr.mxu0 0.0
        %758 = vmatpush1.xpose.msra.mxu0 %v723
        %759 = vmatprep.subr.mxu0 0.0
        %760 = vmatpush1.xpose.msra.mxu0 %v721
        %761 = vmatprep.subr.mxu0 0.0
        %762 = vmatpush1.xpose.msra.mxu0 %v719
        %763 = vmatprep.subr.mxu0 0.0
        %764 = vmatpush1.xpose.msra.mxu0 %v717
        %765 = vmatprep.subr.mxu0 0.0
        %766 = vmatpush2.xpose.msra.mxu0 0.0
        %767 = vmatprep.subr.mxu0 0.0
        %768 = vmatpush2.xpose.msra.mxu0 0.0
        %769 = vmatprep.subr.mxu0 0.0
        %770 = vmatpush2.xpose.msra.mxu0 0.0
        %771 = vmatprep.subr.mxu0 0.0
        %772 = vmatpush2.xpose.msra.mxu0 0.0
        %773 = vmatprep.subr.mxu0 0.0
        %774 = vmatpush2.xpose.msra.mxu0 0.0
        %775 = vmatprep.subr.mxu0 0.0
        %776 = vmatpush2.xpose.msra.mxu0 0.0
        %777 = vmatprep.subr.mxu0 0.0
        %778 = vmatpush2.xpose.msra.mxu0 0.0
        %779 = vmatprep.subr.mxu0 0.0
        %780 = vmatpush2.xpose.msra.mxu0 0.0
        %781 = vmatprep.subr.mxu0 0.0
        %782 = vmatpush2.xpose.msra.mxu0 0.0
        %783 = vmatprep.subr.mxu0 0.0
        %784 = vmatpush2.xpose.msra.mxu0 0.0
        %785 = vmatprep.subr.mxu0 0.0
        %786 = vmatpush2.xpose.msra.mxu0 0.0
        %787 = vmatprep.subr.mxu0 0.0
        %788 = vmatpush2.xpose.msra.mxu0 0.0
        %789 = vmatprep.subr.mxu0 0.0
        %790 = vmatpush2.xpose.msra.mxu0 0.0
        %791 = vmatprep.subr.mxu0 0.0
        %792 = vmatpush2.xpose.msra.mxu0 0.0
        %793 = vmatprep.subr.mxu0 0.0
        %794 = vmatpush2.xpose.msra.mxu0 0.0
        %795 = vmatprep.subr.mxu0 0.0
        %796 = vmatpush2.xpose.msra.mxu0 0.0
        %797 = vmatprep.mubr.f32.mxu0 0.0
        %798 = vmatmul.mubr.f32.gmra.mxu0 %v587
        %v799 = vpop.f32.mrf.mxu0
        %v800 = vadd.f32 %v691, %v799
        %v801 = vpop.f32.mrf.mxu0
        %802 = vmatprep.mubr.f32.mxu0 0.0
        %803 = vmatmul.mubr.f32.gmra.mxu0 %v590
        %v804 = vpop.f32.mrf.mxu0
        %v805 = vadd.f32 %v692, %v804
        %v806 = vpop.f32.mrf.mxu0
        %807 = vdwg.mxu0
        %v809 = vsel %vm243, %v522, 0
        %v812 = vsel %vm243, %v523, 0
        %v815 = vsel %vm243, %v524, 0
        %v818 = vsel %vm243, %v525, 0
        %v821 = vsel %vm243, %v526, 0
        %v824 = vsel %vm243, %v527, 0
        %v827 = vsel %vm243, %v528, 0
        %v830 = vsel %vm243, %v529, 0
        %832 = vmatprep.subr.mxu0 0.0
        %833 = vmatpush1.xpose.msra.mxu0 0.0
        %834 = vmatprep.subr.mxu0 0.0
        %835 = vmatpush1.xpose.msra.mxu0 0.0
        %836 = vmatprep.subr.mxu0 0.0
        %837 = vmatpush1.xpose.msra.mxu0 0.0
        %838 = vmatprep.subr.mxu0 0.0
        %839 = vmatpush1.xpose.msra.mxu0 0.0
        %840 = vmatprep.subr.mxu0 0.0
        %841 = vmatpush1.xpose.msra.mxu0 0.0
        %842 = vmatprep.subr.mxu0 0.0
        %843 = vmatpush1.xpose.msra.mxu0 0.0
        %844 = vmatprep.subr.mxu0 0.0
        %845 = vmatpush1.xpose.msra.mxu0 0.0
        %846 = vmatprep.subr.mxu0 0.0
        %847 = vmatpush1.xpose.msra.mxu0 0.0
        %848 = vmatprep.subr.mxu0 0.0
        %849 = vmatpush1.xpose.msra.mxu0 %v830
        %850 = vmatprep.subr.mxu0 0.0
        %851 = vmatpush1.xpose.msra.mxu0 %v827
        %852 = vmatprep.subr.mxu0 0.0
        %853 = vmatpush1.xpose.msra.mxu0 %v824
        %854 = vmatprep.subr.mxu0 0.0
        %855 = vmatpush1.xpose.msra.mxu0 %v821
        %856 = vmatprep.subr.mxu0 0.0
        %857 = vmatpush1.xpose.msra.mxu0 %v818
        %858 = vmatprep.subr.mxu0 0.0
        %859 = vmatpush1.xpose.msra.mxu0 %v815
        %860 = vmatprep.subr.mxu0 0.0
        %861 = vmatpush1.xpose.msra.mxu0 %v812
        %862 = vmatprep.subr.mxu0 0.0
        %863 = vmatpush1.xpose.msra.mxu0 %v809
        %864 = vmatprep.subr.mxu0 0.0
        %865 = vmatpush2.xpose.msra.mxu0 0.0
        %866 = vmatprep.subr.mxu0 0.0
        %867 = vmatpush2.xpose.msra.mxu0 0.0
        %868 = vmatprep.subr.mxu0 0.0
        %869 = vmatpush2.xpose.msra.mxu0 0.0
        %870 = vmatprep.subr.mxu0 0.0
        %871 = vmatpush2.xpose.msra.mxu0 0.0
        %872 = vmatprep.subr.mxu0 0.0
        %873 = vmatpush2.xpose.msra.mxu0 0.0
        %874 = vmatprep.subr.mxu0 0.0
        %875 = vmatpush2.xpose.msra.mxu0 0.0
        %876 = vmatprep.subr.mxu0 0.0
        %877 = vmatpush2.xpose.msra.mxu0 0.0
        %878 = vmatprep.subr.mxu0 0.0
        %879 = vmatpush2.xpose.msra.mxu0 0.0
        %880 = vmatprep.subr.mxu0 0.0
        %881 = vmatpush2.xpose.msra.mxu0 0.0
        %882 = vmatprep.subr.mxu0 0.0
        %883 = vmatpush2.xpose.msra.mxu0 0.0
        %884 = vmatprep.subr.mxu0 0.0
        %885 = vmatpush2.xpose.msra.mxu0 0.0
        %886 = vmatprep.subr.mxu0 0.0
        %887 = vmatpush2.xpose.msra.mxu0 0.0
        %888 = vmatprep.subr.mxu0 0.0
        %889 = vmatpush2.xpose.msra.mxu0 0.0
        %890 = vmatprep.subr.mxu0 0.0
        %891 = vmatpush2.xpose.msra.mxu0 0.0
        %892 = vmatprep.subr.mxu0 0.0
        %893 = vmatpush2.xpose.msra.mxu0 0.0
        %894 = vmatprep.subr.mxu0 0.0
        %895 = vmatpush2.xpose.msra.mxu0 0.0
        %896 = vmatprep.mubr.f32.mxu0 0.0
        %897 = vmatmul.mubr.f32.gmra.mxu0 %v587
        %v898 = vpop.f32.mrf.mxu0
        %v899 = vadd.f32 0.0, %v898
        %v900 = vpop.f32.mrf.mxu0
        %901 = vmatprep.mubr.f32.mxu0 0.0
        %902 = vmatmul.mubr.f32.gmra.mxu0 %v590
        %v903 = vpop.f32.mrf.mxu0
        %v904 = vadd.f32 0.0, %v903
        %v905 = vpop.f32.mrf.mxu0
        %906 = vdwg.mxu0
        %v907 = vmul.f32 %v899, %v303
        %v908 = vmul.f32 %v904, %v304
        %v909 = vadd.f32 %v800, %v907
        %v910 = vadd.f32 %v805, %v908
        %v912 = vsel %vm243, %v530, 0
        %v915 = vsel %vm243, %v531, 0
        %v918 = vsel %vm243, %v532, 0
        %v921 = vsel %vm243, %v533, 0
        %v924 = vsel %vm243, %v534, 0
        %v927 = vsel %vm243, %v535, 0
        %v930 = vsel %vm243, %v536, 0
        %v933 = vsel %vm243, %v537, 0
        %935 = vmatprep.subr.mxu0 0.0
        %936 = vmatpush1.xpose.msra.mxu0 0.0
        %937 = vmatprep.subr.mxu0 0.0
        %938 = vmatpush1.xpose.msra.mxu0 0.0
        %939 = vmatprep.subr.mxu0 0.0
        %940 = vmatpush1.xpose.msra.mxu0 0.0
        %941 = vmatprep.subr.mxu0 0.0
        %942 = vmatpush1.xpose.msra.mxu0 0.0
        %943 = vmatprep.subr.mxu0 0.0
        %944 = vmatpush1.xpose.msra.mxu0 0.0
        %945 = vmatprep.subr.mxu0 0.0
        %946 = vmatpush1.xpose.msra.mxu0 0.0
        %947 = vmatprep.subr.mxu0 0.0
        %948 = vmatpush1.xpose.msra.mxu0 0.0
        %949 = vmatprep.subr.mxu0 0.0
        %950 = vmatpush1.xpose.msra.mxu0 0.0
        %951 = vmatprep.subr.mxu0 0.0
        %952 = vmatpush1.xpose.msra.mxu0 %v933
        %953 = vmatprep.subr.mxu0 0.0
        %954 = vmatpush1.xpose.msra.mxu0 %v930
        %955 = vmatprep.subr.mxu0 0.0
        %956 = vmatpush1.xpose.msra.mxu0 %v927
        %957 = vmatprep.subr.mxu0 0.0
        %958 = vmatpush1.xpose.msra.mxu0 %v924
        %959 = vmatprep.subr.mxu0 0.0
        %960 = vmatpush1.xpose.msra.mxu0 %v921
        %961 = vmatprep.subr.mxu0 0.0
        %962 = vmatpush1.xpose.msra.mxu0 %v918
        %963 = vmatprep.subr.mxu0 0.0
        %964 = vmatpush1.xpose.msra.mxu0 %v915
        %965 = vmatprep.subr.mxu0 0.0
        %966 = vmatpush1.xpose.msra.mxu0 %v912
        %967 = vmatprep.subr.mxu0 0.0
        %968 = vmatpush2.xpose.msra.mxu0 0.0
        %969 = vmatprep.subr.mxu0 0.0
        %970 = vmatpush2.xpose.msra.mxu0 0.0
        %971 = vmatprep.subr.mxu0 0.0
        %972 = vmatpush2.xpose.msra.mxu0 0.0
        %973 = vmatprep.subr.mxu0 0.0
        %974 = vmatpush2.xpose.msra.mxu0 0.0
        %975 = vmatprep.subr.mxu0 0.0
        %976 = vmatpush2.xpose.msra.mxu0 0.0
        %977 = vmatprep.subr.mxu0 0.0
        %978 = vmatpush2.xpose.msra.mxu0 0.0
        %979 = vmatprep.subr.mxu0 0.0
        %980 = vmatpush2.xpose.msra.mxu0 0.0
        %981 = vmatprep.subr.mxu0 0.0
        %982 = vmatpush2.xpose.msra.mxu0 0.0
        %983 = vmatprep.subr.mxu0 0.0
        %984 = vmatpush2.xpose.msra.mxu0 0.0
        %985 = vmatprep.subr.mxu0 0.0
        %986 = vmatpush2.xpose.msra.mxu0 0.0
        %987 = vmatprep.subr.mxu0 0.0
        %988 = vmatpush2.xpose.msra.mxu0 0.0
        %989 = vmatprep.subr.mxu0 0.0
        %990 = vmatpush2.xpose.msra.mxu0 0.0
        %991 = vmatprep.subr.mxu0 0.0
        %992 = vmatpush2.xpose.msra.mxu0 0.0
        %993 = vmatprep.subr.mxu0 0.0
        %994 = vmatpush2.xpose.msra.mxu0 0.0
        %995 = vmatprep.subr.mxu0 0.0
        %996 = vmatpush2.xpose.msra.mxu0 0.0
        %997 = vmatprep.subr.mxu0 0.0
        %998 = vmatpush2.xpose.msra.mxu0 0.0
        %999 = vmatprep.mubr.f32.mxu0 0.0
        %1000 = vmatmul.mubr.f32.gmra.mxu0 %v587
        %v1001 = vpop.f32.mrf.mxu0
        %v1002 = vadd.f32 0.0, %v1001
        %v1003 = vpop.f32.mrf.mxu0
        %1004 = vmatprep.mubr.f32.mxu0 0.0
        %1005 = vmatmul.mubr.f32.gmra.mxu0 %v590
        %v1006 = vpop.f32.mrf.mxu0
        %v1007 = vadd.f32 0.0, %v1006
        %v1008 = vpop.f32.mrf.mxu0
        %1009 = vdwg.mxu0
        %v1010 = vmul.f32 %v1002, %v331
        %v1011 = vmul.f32 %v1007, %v332
        %v1012 = vadd.f32 %v909, %v1010
        %v1013 = vadd.f32 %v910, %v1011
        %v1015 = vsel %vm243, %v538, 0
        %v1018 = vsel %vm243, %v539, 0
        %v1021 = vsel %vm243, %v540, 0
        %v1024 = vsel %vm243, %v541, 0
        %v1027 = vsel %vm243, %v542, 0
        %v1030 = vsel %vm243, %v543, 0
        %v1033 = vsel %vm243, %v544, 0
        %v1036 = vsel %vm243, %v545, 0
        %1038 = vmatprep.subr.mxu0 0.0
        %1039 = vmatpush1.xpose.msra.mxu0 0.0
        %1040 = vmatprep.subr.mxu0 0.0
        %1041 = vmatpush1.xpose.msra.mxu0 0.0
        %1042 = vmatprep.subr.mxu0 0.0
        %1043 = vmatpush1.xpose.msra.mxu0 0.0
        %1044 = vmatprep.subr.mxu0 0.0
        %1045 = vmatpush1.xpose.msra.mxu0 0.0
        %1046 = vmatprep.subr.mxu0 0.0
        %1047 = vmatpush1.xpose.msra.mxu0 0.0
        %1048 = vmatprep.subr.mxu0 0.0
        %1049 = vmatpush1.xpose.msra.mxu0 0.0
        %1050 = vmatprep.subr.mxu0 0.0
        %1051 = vmatpush1.xpose.msra.mxu0 0.0
        %1052 = vmatprep.subr.mxu0 0.0
        %1053 = vmatpush1.xpose.msra.mxu0 0.0
        %1054 = vmatprep.subr.mxu0 0.0
        %1055 = vmatpush1.xpose.msra.mxu0 %v1036
        %1056 = vmatprep.subr.mxu0 0.0
        %1057 = vmatpush1.xpose.msra.mxu0 %v1033
        %1058 = vmatprep.subr.mxu0 0.0
        %1059 = vmatpush1.xpose.msra.mxu0 %v1030
        %1060 = vmatprep.subr.mxu0 0.0
        %1061 = vmatpush1.xpose.msra.mxu0 %v1027
        %1062 = vmatprep.subr.mxu0 0.0
        %1063 = vmatpush1.xpose.msra.mxu0 %v1024
        %1064 = vmatprep.subr.mxu0 0.0
        %1065 = vmatpush1.xpose.msra.mxu0 %v1021
        %1066 = vmatprep.subr.mxu0 0.0
        %1067 = vmatpush1.xpose.msra.mxu0 %v1018
        %1068 = vmatprep.subr.mxu0 0.0
        %1069 = vmatpush1.xpose.msra.mxu0 %v1015
        %1070 = vmatprep.subr.mxu0 0.0
        %1071 = vmatpush2.xpose.msra.mxu0 0.0
        %1072 = vmatprep.subr.mxu0 0.0
        %1073 = vmatpush2.xpose.msra.mxu0 0.0
        %1074 = vmatprep.subr.mxu0 0.0
        %1075 = vmatpush2.xpose.msra.mxu0 0.0
        %1076 = vmatprep.subr.mxu0 0.0
        %1077 = vmatpush2.xpose.msra.mxu0 0.0
        %1078 = vmatprep.subr.mxu0 0.0
        %1079 = vmatpush2.xpose.msra.mxu0 0.0
        %1080 = vmatprep.subr.mxu0 0.0
        %1081 = vmatpush2.xpose.msra.mxu0 0.0
        %1082 = vmatprep.subr.mxu0 0.0
        %1083 = vmatpush2.xpose.msra.mxu0 0.0
        %1084 = vmatprep.subr.mxu0 0.0
        %1085 = vmatpush2.xpose.msra.mxu0 0.0
        %1086 = vmatprep.subr.mxu0 0.0
        %1087 = vmatpush2.xpose.msra.mxu0 0.0
        %1088 = vmatprep.subr.mxu0 0.0
        %1089 = vmatpush2.xpose.msra.mxu0 0.0
        %1090 = vmatprep.subr.mxu0 0.0
        %1091 = vmatpush2.xpose.msra.mxu0 0.0
        %1092 = vmatprep.subr.mxu0 0.0
        %1093 = vmatpush2.xpose.msra.mxu0 0.0
        %1094 = vmatprep.subr.mxu0 0.0
        %1095 = vmatpush2.xpose.msra.mxu0 0.0
        %1096 = vmatprep.subr.mxu0 0.0
        %1097 = vmatpush2.xpose.msra.mxu0 0.0
        %1098 = vmatprep.subr.mxu0 0.0
        %1099 = vmatpush2.xpose.msra.mxu0 0.0
        %1100 = vmatprep.subr.mxu0 0.0
        %1101 = vmatpush2.xpose.msra.mxu0 0.0
        %1102 = vmatprep.mubr.f32.mxu0 0.0
        %1103 = vmatmul.mubr.f32.gmra.mxu0 %v587
        %v1104 = vpop.f32.mrf.mxu0
        %v1105 = vadd.f32 0.0, %v1104
        %v1106 = vpop.f32.mrf.mxu0
        %1107 = vmatprep.mubr.f32.mxu0 0.0
        %1108 = vmatmul.mubr.f32.gmra.mxu0 %v590
        %v1109 = vpop.f32.mrf.mxu0
        %v1110 = vadd.f32 0.0, %v1109
        %v1111 = vpop.f32.mrf.mxu0
        %1112 = vdwg.mxu0
        %v1113 = vmul.f32 %v1105, %v359
        %v1114 = vmul.f32 %v1110, %v360
        %v1115 = vadd.f32 %v1012, %v1113
        %v1116 = vadd.f32 %v1013, %v1114
        %vm1117 = vcmp.gt.f32.partialorder %v247, 0.5
        %vm1118 = vcmp.gt.f32.partialorder %v248, 0.5
        %v1119 = vsel %vm1117, %v1115, -1e+30
        %v1120 = vsel %vm1118, %v1116, -1e+30
        %vm1121 = vcmask 523264
        %v1122 = vsel %vm1121, %v1119, -inf
        %1123 = vmax.xlane.f32.xlu0 %v1122
        %v1124 = vpop.xlane.xlu0 %1123
        %v1125 = vsel %vm1121, %v1120, -inf
        %1126 = vmax.xlane.f32.xlu0 %v1125
        %v1127 = vpop.xlane.xlu0 %1126
        %v1128 = vsub.f32 %v1119, %v1124
        %v1129 = vsub.f32 %v1120, %v1127
        %v1130 = vmul.f32 %v1128, 1.442695
        %v1131 = vpow.pop %v1130
        %v1132 = vmul.f32 %v1129, 1.442695
        %v1133 = vpow.pop %v1132
        %v1134 = vmul.f32 %v1131, %v247
        %v1135 = vmul.f32 %v1133, %v248
        %v1137 = vsel %vm1121, %v1134, 0
        %v1140 = vsel %vm1121, %v1135, 0
        %1142 = vmatprep.subr.mxu0 0.0
        %1143 = vmatpush1.msra.mxu0 0.0
        %1144 = vmatprep.subr.mxu0 0.0
        %1145 = vmatpush1.msra.mxu0 0.0
        %1146 = vmatprep.subr.mxu0 0.0
        %1147 = vmatpush1.msra.mxu0 0.0
        %1148 = vmatprep.subr.mxu0 0.0
        %1149 = vmatpush1.msra.mxu0 0.0
        %1150 = vmatprep.subr.mxu0 0.0
        %1151 = vmatpush1.msra.mxu0 0.0
        %1152 = vmatprep.subr.mxu0 0.0
        %1153 = vmatpush1.msra.mxu0 0.0
        %1154 = vmatprep.subr.mxu0 0.0
        %1155 = vmatpush1.msra.mxu0 0.0
        %1156 = vmatprep.subr.mxu0 0.0
        %1157 = vmatpush1.msra.mxu0 0.0
        %1158 = vmatprep.subr.mxu0 0.0
        %1159 = vmatpush1.msra.mxu0 %v368
        %1160 = vmatprep.subr.mxu0 0.0
        %1161 = vmatpush1.msra.mxu0 %v367
        %1162 = vmatprep.subr.mxu0 0.0
        %1163 = vmatpush1.msra.mxu0 %v366
        %1164 = vmatprep.subr.mxu0 0.0
        %1165 = vmatpush1.msra.mxu0 %v365
        %1166 = vmatprep.subr.mxu0 0.0
        %1167 = vmatpush1.msra.mxu0 %v364
        %1168 = vmatprep.subr.mxu0 0.0
        %1169 = vmatpush1.msra.mxu0 %v363
        %1170 = vmatprep.subr.mxu0 0.0
        %1171 = vmatpush1.msra.mxu0 %v362
        %1172 = vmatprep.subr.mxu0 0.0
        %1173 = vmatpush1.msra.mxu0 %v361
        %1174 = vmatprep.subr.mxu0 0.0
        %1175 = vmatpush2.msra.mxu0 0.0
        %1176 = vmatprep.subr.mxu0 0.0
        %1177 = vmatpush2.msra.mxu0 0.0
        %1178 = vmatprep.subr.mxu0 0.0
        %1179 = vmatpush2.msra.mxu0 0.0
        %1180 = vmatprep.subr.mxu0 0.0
        %1181 = vmatpush2.msra.mxu0 0.0
        %1182 = vmatprep.subr.mxu0 0.0
        %1183 = vmatpush2.msra.mxu0 0.0
        %1184 = vmatprep.subr.mxu0 0.0
        %1185 = vmatpush2.msra.mxu0 0.0
        %1186 = vmatprep.subr.mxu0 0.0
        %1187 = vmatpush2.msra.mxu0 0.0
        %1188 = vmatprep.subr.mxu0 0.0
        %1189 = vmatpush2.msra.mxu0 0.0
        %1190 = vmatprep.subr.mxu0 0.0
        %1191 = vmatpush2.msra.mxu0 0.0
        %1192 = vmatprep.subr.mxu0 0.0
        %1193 = vmatpush2.msra.mxu0 0.0
        %1194 = vmatprep.subr.mxu0 0.0
        %1195 = vmatpush2.msra.mxu0 0.0
        %1196 = vmatprep.subr.mxu0 0.0
        %1197 = vmatpush2.msra.mxu0 0.0
        %1198 = vmatprep.subr.mxu0 0.0
        %1199 = vmatpush2.msra.mxu0 0.0
        %1200 = vmatprep.subr.mxu0 0.0
        %1201 = vmatpush2.msra.mxu0 0.0
        %1202 = vmatprep.subr.mxu0 0.0
        %1203 = vmatpush2.msra.mxu0 0.0
        %1204 = vmatprep.subr.mxu0 0.0
        %1205 = vmatpush2.msra.mxu0 0.0
        %1206 = vmatprep.mubr.f32.mxu0 0.0
        %1207 = vmatmul.mubr.f32.gmra.mxu0 %v1137
        %v1208 = vpop.f32.mrf.mxu0
        %v1209 = vadd.f32 0.0, %v1208
        %v1210 = vpop.f32.mrf.mxu0
        %1211 = vmatprep.mubr.f32.mxu0 0.0
        %1212 = vmatmul.mubr.f32.gmra.mxu0 %v1140
        %v1213 = vpop.f32.mrf.mxu0
        %v1214 = vadd.f32 0.0, %v1213
        %v1215 = vpop.f32.mrf.mxu0
        %1216 = vdwg.mxu0
        %v1217 = vmax.f32 %v1209, 1e-30
        %v1218 = vmax.f32 %v1214, 1e-30
        %v1219 = vrcp.pop %v1217
        %v1220 = vrcp.pop %v1218
        %1221 = vrot.lane.b32.xlu0 %v361, 64
        %v1222 = vpop.permute.xlu0 %1221
        %1223 = vrot.lane.b32.xlu0 %v362, 64
        %v1224 = vpop.permute.xlu0 %1223
        %1225 = vrot.lane.b32.xlu0 %v363, 64
        %v1226 = vpop.permute.xlu0 %1225
        %1227 = vrot.lane.b32.xlu0 %v364, 64
        %v1228 = vpop.permute.xlu0 %1227
        %1229 = vrot.lane.b32.xlu0 %v365, 64
        %v1230 = vpop.permute.xlu0 %1229
        %1231 = vrot.lane.b32.xlu0 %v366, 64
        %v1232 = vpop.permute.xlu0 %1231
        %1233 = vrot.lane.b32.xlu0 %v367, 64
        %v1234 = vpop.permute.xlu0 %1233
        %1235 = vrot.lane.b32.xlu0 %v368, 64
        %v1236 = vpop.permute.xlu0 %1235
        %v1245 = vmul.f32 %v506, %v1222
        %v1246 = vmul.f32 %v511, %v1224
        %v1247 = vmul.f32 %v506, %v1226
        %v1248 = vmul.f32 %v511, %v1228
        %v1249 = vmul.f32 %v506, %v1230
        %v1250 = vmul.f32 %v511, %v1232
        %v1251 = vmul.f32 %v506, %v1234
        %v1252 = vmul.f32 %v511, %v1236
        %v1253 = vmul.f32 %v1134, %v275
        %v1254 = vmul.f32 %v1135, %v276
        %v1255 = vmul.f32 %v1134, %v303
        %v1256 = vmul.f32 %v1135, %v304
        %v1257 = vmul.f32 %v1134, %v331
        %v1258 = vmul.f32 %v1135, %v332
        %v1259 = vmul.f32 %v1134, %v359
        %v1260 = vmul.f32 %v1135, %v360
        %1263 = vrot.lane.b32.xlu0 %v1255, 64
        %v1264 = vpop.permute.xlu0 %1263
        %1265 = vrot.lane.b32.xlu0 %v1256, 64
        %v1266 = vpop.permute.xlu0 %1265
        %1271 = vrot.lane.b32.xlu0 %v1259, 64
        %v1272 = vpop.permute.xlu0 %1271
        %1273 = vrot.lane.b32.xlu0 %v1260, 64
        %v1274 = vpop.permute.xlu0 %1273
        %v1277 = vsel %vm1121, %v1253, %v1264
        %v1278 = vsel %vm1121, %v1254, %v1266
        %v1279 = vsel %vm1121, %v1257, %v1272
        %v1280 = vsel %vm1121, %v1258, %v1274
        %1281 = vmatprep.subr.mxu0 0.0
        %1282 = vmatpush1.msra.mxu0 %v529
        %1283 = vmatprep.subr.mxu0 0.0
        %1284 = vmatpush1.msra.mxu0 %v528
        %1285 = vmatprep.subr.mxu0 0.0
        %1286 = vmatpush1.msra.mxu0 %v527
        %1287 = vmatprep.subr.mxu0 0.0
        %1288 = vmatpush1.msra.mxu0 %v526
        %1289 = vmatprep.subr.mxu0 0.0
        %1290 = vmatpush1.msra.mxu0 %v525
        %1291 = vmatprep.subr.mxu0 0.0
        %1292 = vmatpush1.msra.mxu0 %v524
        %1293 = vmatprep.subr.mxu0 0.0
        %1294 = vmatpush1.msra.mxu0 %v523
        %1295 = vmatprep.subr.mxu0 0.0
        %1296 = vmatpush1.msra.mxu0 %v522
        %1297 = vmatprep.subr.mxu0 0.0
        %1298 = vmatpush1.msra.mxu0 %v521
        %1299 = vmatprep.subr.mxu0 0.0
        %1300 = vmatpush1.msra.mxu0 %v520
        %1301 = vmatprep.subr.mxu0 0.0
        %1302 = vmatpush1.msra.mxu0 %v519
        %1303 = vmatprep.subr.mxu0 0.0
        %1304 = vmatpush1.msra.mxu0 %v518
        %1305 = vmatprep.subr.mxu0 0.0
        %1306 = vmatpush1.msra.mxu0 %v517
        %1307 = vmatprep.subr.mxu0 0.0
        %1308 = vmatpush1.msra.mxu0 %v516
        %1309 = vmatprep.subr.mxu0 0.0
        %1310 = vmatpush1.msra.mxu0 %v515
        %1311 = vmatprep.subr.mxu0 0.0
        %1312 = vmatpush1.msra.mxu0 %v514
        %1313 = vmatprep.subr.mxu0 0.0
        %1314 = vmatpush2.msra.mxu0 %v545
        %1315 = vmatprep.subr.mxu0 0.0
        %1316 = vmatpush2.msra.mxu0 %v544
        %1317 = vmatprep.subr.mxu0 0.0
        %1318 = vmatpush2.msra.mxu0 %v543
        %1319 = vmatprep.subr.mxu0 0.0
        %1320 = vmatpush2.msra.mxu0 %v542
        %1321 = vmatprep.subr.mxu0 0.0
        %1322 = vmatpush2.msra.mxu0 %v541
        %1323 = vmatprep.subr.mxu0 0.0
        %1324 = vmatpush2.msra.mxu0 %v540
        %1325 = vmatprep.subr.mxu0 0.0
        %1326 = vmatpush2.msra.mxu0 %v539
        %1327 = vmatprep.subr.mxu0 0.0
        %1328 = vmatpush2.msra.mxu0 %v538
        %1329 = vmatprep.subr.mxu0 0.0
        %1330 = vmatpush2.msra.mxu0 %v537
        %1331 = vmatprep.subr.mxu0 0.0
        %1332 = vmatpush2.msra.mxu0 %v536
        %1333 = vmatprep.subr.mxu0 0.0
        %1334 = vmatpush2.msra.mxu0 %v535
        %1335 = vmatprep.subr.mxu0 0.0
        %1336 = vmatpush2.msra.mxu0 %v534
        %1337 = vmatprep.subr.mxu0 0.0
        %1338 = vmatpush2.msra.mxu0 %v533
        %1339 = vmatprep.subr.mxu0 0.0
        %1340 = vmatpush2.msra.mxu0 %v532
        %1341 = vmatprep.subr.mxu0 0.0
        %1342 = vmatpush2.msra.mxu0 %v531
        %1343 = vmatprep.subr.mxu0 0.0
        %1344 = vmatpush2.msra.mxu0 %v530
        %1345 = vmatprep.mubr.f32.mxu0 %v1279
        %1346 = vmatmul.mubr.f32.gmra.mxu0 %v1277
        %v1347 = vpop.f32.mrf.mxu0
        %v1348 = vadd.f32 0.0, %v1347
        %v1349 = vpop.f32.mrf.mxu0
        %1350 = vmatprep.mubr.f32.mxu0 %v1280
        %1351 = vmatmul.mubr.f32.gmra.mxu0 %v1278
        %v1352 = vpop.f32.mrf.mxu0
        %v1353 = vadd.f32 0.0, %v1352
        %v1354 = vpop.f32.mrf.mxu0
        %1355 = vdwg.mxu0
        %1364 = vrot.lane.b32.xlu0 %v1245, 64
        %v1365 = vpop.permute.xlu0 %1364
        %1366 = vrot.lane.b32.xlu0 %v1246, 64
        %v1367 = vpop.permute.xlu0 %1366
        %1368 = vrot.lane.b32.xlu0 %v1247, 64
        %v1369 = vpop.permute.xlu0 %1368
        %1370 = vrot.lane.b32.xlu0 %v1248, 64
        %v1371 = vpop.permute.xlu0 %1370
        %1372 = vrot.lane.b32.xlu0 %v1249, 64
        %v1373 = vpop.permute.xlu0 %1372
        %1374 = vrot.lane.b32.xlu0 %v1250, 64
        %v1375 = vpop.permute.xlu0 %1374
        %1376 = vrot.lane.b32.xlu0 %v1251, 64
        %v1377 = vpop.permute.xlu0 %1376
        %1378 = vrot.lane.b32.xlu0 %v1252, 64
        %v1379 = vpop.permute.xlu0 %1378
        %1388 = vmatprep.subr.mxu0 0.0
        %1389 = vmatpush1.msra.mxu0 0.0
        %1390 = vmatprep.subr.mxu0 0.0
        %1391 = vmatpush1.msra.mxu0 0.0
        %1392 = vmatprep.subr.mxu0 0.0
        %1393 = vmatpush1.msra.mxu0 0.0
        %1394 = vmatprep.subr.mxu0 0.0
        %1395 = vmatpush1.msra.mxu0 0.0
        %1396 = vmatprep.subr.mxu0 0.0
        %1397 = vmatpush1.msra.mxu0 0.0
        %1398 = vmatprep.subr.mxu0 0.0
        %1399 = vmatpush1.msra.mxu0 0.0
        %1400 = vmatprep.subr.mxu0 0.0
        %1401 = vmatpush1.msra.mxu0 0.0
        %1402 = vmatprep.subr.mxu0 0.0
        %1403 = vmatpush1.msra.mxu0 0.0
        %1404 = vmatprep.subr.mxu0 0.0
        %1405 = vmatpush1.msra.mxu0 %v1379
        %1406 = vmatprep.subr.mxu0 0.0
        %1407 = vmatpush1.msra.mxu0 %v1377
        %1408 = vmatprep.subr.mxu0 0.0
        %1409 = vmatpush1.msra.mxu0 %v1375
        %1410 = vmatprep.subr.mxu0 0.0
        %1411 = vmatpush1.msra.mxu0 %v1373
        %1412 = vmatprep.subr.mxu0 0.0
        %1413 = vmatpush1.msra.mxu0 %v1371
        %1414 = vmatprep.subr.mxu0 0.0
        %1415 = vmatpush1.msra.mxu0 %v1369
        %1416 = vmatprep.subr.mxu0 0.0
        %1417 = vmatpush1.msra.mxu0 %v1367
        %1418 = vmatprep.subr.mxu0 0.0
        %1419 = vmatpush1.msra.mxu0 %v1365
        %1420 = vmatprep.subr.mxu0 0.0
        %1421 = vmatpush2.msra.mxu0 0.0
        %1422 = vmatprep.subr.mxu0 0.0
        %1423 = vmatpush2.msra.mxu0 0.0
        %1424 = vmatprep.subr.mxu0 0.0
        %1425 = vmatpush2.msra.mxu0 0.0
        %1426 = vmatprep.subr.mxu0 0.0
        %1427 = vmatpush2.msra.mxu0 0.0
        %1428 = vmatprep.subr.mxu0 0.0
        %1429 = vmatpush2.msra.mxu0 0.0
        %1430 = vmatprep.subr.mxu0 0.0
        %1431 = vmatpush2.msra.mxu0 0.0
        %1432 = vmatprep.subr.mxu0 0.0
        %1433 = vmatpush2.msra.mxu0 0.0
        %1434 = vmatprep.subr.mxu0 0.0
        %1435 = vmatpush2.msra.mxu0 0.0
        %1436 = vmatprep.subr.mxu0 0.0
        %1437 = vmatpush2.msra.mxu0 0.0
        %1438 = vmatprep.subr.mxu0 0.0
        %1439 = vmatpush2.msra.mxu0 0.0
        %1440 = vmatprep.subr.mxu0 0.0
        %1441 = vmatpush2.msra.mxu0 0.0
        %1442 = vmatprep.subr.mxu0 0.0
        %1443 = vmatpush2.msra.mxu0 0.0
        %1444 = vmatprep.subr.mxu0 0.0
        %1445 = vmatpush2.msra.mxu0 0.0
        %1446 = vmatprep.subr.mxu0 0.0
        %1447 = vmatpush2.msra.mxu0 0.0
        %1448 = vmatprep.subr.mxu0 0.0
        %1449 = vmatpush2.msra.mxu0 0.0
        %1450 = vmatprep.subr.mxu0 0.0
        %1451 = vmatpush2.msra.mxu0 0.0
        %1452 = vmatprep.mubr.f32.mxu0 0.0
        %1453 = vmatmul.mubr.f32.gmra.mxu0 %v1137
        %v1454 = vpop.f32.mrf.mxu0
        %v1455 = vadd.f32 %v1348, %v1454
        %v1456 = vpop.f32.mrf.mxu0
        %1457 = vmatprep.mubr.f32.mxu0 0.0
        %1458 = vmatmul.mubr.f32.gmra.mxu0 %v1140
        %v1459 = vpop.f32.mrf.mxu0
        %v1460 = vadd.f32 %v1353, %v1459
        %v1461 = vpop.f32.mrf.mxu0
        %1462 = vdwg.mxu0
        %v1463 = vmul.f32 %v1455, %v1219
        %v1464 = vmul.f32 %v1460, %v1220
        %v1465 = vadd.f32 %v216, %v1463
        %v1466 = vadd.f32 %v217, %v1464
        %1467 = vrot.lane.b32.xlu0 %v506, 32
        %v1468 = vpop.permute.xlu0 %1467
        %1469 = vrot.lane.b32.xlu0 %v511, 32
        %v1470 = vpop.permute.xlu0 %1469
        %v1473 = vadd.f32 %v1465, %v1468
        %v1474 = vadd.f32 %v1466, %v1470
        %v1475 = vld [vmem:[%s2 + $0x41] sm:$0x1]
        %v1476 = vld [vmem:[%s2 + $0x43] sm:$0x1]
        %v1477 = vsel %vm243, %v1473, 0.0
        %1478 = vadd.xlane.f32.xlu0 %v1477
        %v1479 = vpop.xlane.xlu0 %1478
        %v1480 = vsel %vm243, %v1474, 0.0
        %1481 = vadd.xlane.f32.xlu0 %v1480
        %v1482 = vpop.xlane.xlu0 %1481
        %v1483 = vmul.f32 %v1479, %v377
        %v1484 = vmul.f32 %v1482, %v377
        %v1485 = vsub.f32 %v1473, %v1483
        %v1486 = vsub.f32 %v1474, %v1484
        %v1487 = vmul.f32 %v1485, %v1485
        %v1488 = vmul.f32 %v1486, %v1486
        %v1489 = vsel %vm243, %v1487, 0.0
        %1490 = vadd.xlane.f32.xlu0 %v1489
        %v1491 = vpop.xlane.xlu0 %1490
        %v1492 = vsel %vm243, %v1488, 0.0
        %1493 = vadd.xlane.f32.xlu0 %v1492
        %v1494 = vpop.xlane.xlu0 %1493
        %v1495 = vmul.f32 %v1491, 0.032258064
        %v1496 = vmul.f32 %v1494, 0.032258064
        %v1497 = vrsqrt.pop %v1495
        %v1498 = vmul.f32 %v1495, %v1497
        %vm1499 = vcmp.eq.f32.partialorder %v1495, inf
        %v1500 = vsel %vm1499, %v1495, %v1498
        %vm1501 = vcmp.eq.f32.partialorder %v1495, 0.0
        %v1502 = vand.u32 %v1495, 2147483648
        %v1503 = vsel %vm1501, %v1502, %v1500
        %v1504 = vrsqrt.pop %v1496
        %v1505 = vmul.f32 %v1496, %v1504
        %vm1506 = vcmp.eq.f32.partialorder %v1496, inf
        %v1507 = vsel %vm1506, %v1496, %v1505
        %vm1508 = vcmp.eq.f32.partialorder %v1496, 0.0
        %v1509 = vand.u32 %v1496, 2147483648
        %v1510 = vsel %vm1508, %v1509, %v1507
        %v1511 = vadd.f32 %v1503, 1e-06
        %v1512 = vadd.f32 %v1510, 1e-06
        %v1513 = vrcp.pop %v1511
        %v1514 = vrcp.pop %v1512
        %v1515 = vmul.f32 %v1485, %v1513
        %v1516 = vmul.f32 %v1486, %v1514
        %v1517 = vlaneseq
        %v1518 = vshrl.u32 %v1517, 7
        %v1519 = vsub.s32 0, %v1518
        %v1520 = vrot.slane %v1475, %v1519
        %v1521 = vmul.f32 %v1520, %v1515
        %v1522 = vmul.f32 %v1520, %v1516
        %v1523 = vlaneseq
        %v1524 = vshrl.u32 %v1523, 7
        %v1525 = vsub.s32 0, %v1524
        %v1526 = vrot.slane %v1476, %v1525
        %v1527 = vadd.f32 %v1521, %v1526
        %v1528 = vadd.f32 %v1522, %v1526
        %v1529 = vld [vmem:[%s3 + $0x20] sm:$0xff]
        %v1530 = vld [vmem:[%s3 + $0x28] sm:$0xff]
        %v1531 = vld [vmem:[%s3 + $0x30] sm:$0xff]
        %v1532 = vld [vmem:[%s3 + $0x38] sm:$0xff]
        %v1533 = vld [vmem:[%s3 + $0x41] sm:$0x1]
        %v1534 = vlaneseq
        %v1535 = vshrl.u32 %v1534, 7
        %v1536 = vsub.s32 0, %v1535
        %v1537 = vrot.slane %v1533, %v1536
        %v1539 = vsel %vm243, %v1527, 0
        %v1542 = vsel %vm243, %v1528, 0
        %1544 = vmatprep.subr.mxu0 0.0
        %1545 = vmatpush1.msra.mxu0 0.0
        %1546 = vmatprep.subr.mxu0 0.0
        %1547 = vmatpush1.msra.mxu0 0.0
        %1548 = vmatprep.subr.mxu0 0.0
        %1549 = vmatpush1.msra.mxu0 0.0
        %1550 = vmatprep.subr.mxu0 0.0
        %1551 = vmatpush1.msra.mxu0 0.0
        %1552 = vmatprep.subr.mxu0 0.0
        %1553 = vmatpush1.msra.mxu0 0.0
        %1554 = vmatprep.subr.mxu0 0.0
        %1555 = vmatpush1.msra.mxu0 0.0
        %1556 = vmatprep.subr.mxu0 0.0
        %1557 = vmatpush1.msra.mxu0 0.0
        %1558 = vmatprep.subr.mxu0 0.0
        %1559 = vmatpush1.msra.mxu0 0.0
        %1560 = vmatprep.subr.mxu0 0.0
        %1561 = vmatpush1.msra.mxu0 0.0
        %1562 = vmatprep.subr.mxu0 0.0
        %1563 = vmatpush1.msra.mxu0 0.0
        %1564 = vmatprep.subr.mxu0 0.0
        %1565 = vmatpush1.msra.mxu0 0.0
        %1566 = vmatprep.subr.mxu0 0.0
        %1567 = vmatpush1.msra.mxu0 0.0
        %1568 = vmatprep.subr.mxu0 0.0
        %1569 = vmatpush1.msra.mxu0 %v1532
        %1570 = vmatprep.subr.mxu0 0.0
        %1571 = vmatpush1.msra.mxu0 %v1531
        %1572 = vmatprep.subr.mxu0 0.0
        %1573 = vmatpush1.msra.mxu0 %v1530
        %1574 = vmatprep.subr.mxu0 0.0
        %1575 = vmatpush1.msra.mxu0 %v1529
        %1576 = vmatprep.subr.mxu0 0.0
        %1577 = vmatpush2.msra.mxu0 0.0
        %1578 = vmatprep.subr.mxu0 0.0
        %1579 = vmatpush2.msra.mxu0 0.0
        %1580 = vmatprep.subr.mxu0 0.0
        %1581 = vmatpush2.msra.mxu0 0.0
        %1582 = vmatprep.subr.mxu0 0.0
        %1583 = vmatpush2.msra.mxu0 0.0
        %1584 = vmatprep.subr.mxu0 0.0
        %1585 = vmatpush2.msra.mxu0 0.0
        %1586 = vmatprep.subr.mxu0 0.0
        %1587 = vmatpush2.msra.mxu0 0.0
        %1588 = vmatprep.subr.mxu0 0.0
        %1589 = vmatpush2.msra.mxu0 0.0
        %1590 = vmatprep.subr.mxu0 0.0
        %1591 = vmatpush2.msra.mxu0 0.0
        %1592 = vmatprep.subr.mxu0 0.0
        %1593 = vmatpush2.msra.mxu0 0.0
        %1594 = vmatprep.subr.mxu0 0.0
        %1595 = vmatpush2.msra.mxu0 0.0
        %1596 = vmatprep.subr.mxu0 0.0
        %1597 = vmatpush2.msra.mxu0 0.0
        %1598 = vmatprep.subr.mxu0 0.0
        %1599 = vmatpush2.msra.mxu0 0.0
        %1600 = vmatprep.subr.mxu0 0.0
        %1601 = vmatpush2.msra.mxu0 0.0
        %1602 = vmatprep.subr.mxu0 0.0
        %1603 = vmatpush2.msra.mxu0 0.0
        %1604 = vmatprep.subr.mxu0 0.0
        %1605 = vmatpush2.msra.mxu0 0.0
        %1606 = vmatprep.subr.mxu0 0.0
        %1607 = vmatpush2.msra.mxu0 0.0
        %1608 = vmatprep.mubr.f32.mxu0 0.0
        %1609 = vmatmul.mubr.f32.gmra.mxu0 %v1539
        %v1610 = vpop.f32.mrf.mxu0
        %v1611 = vadd.f32 %v1537, %v1610
        %v1612 = vpop.f32.mrf.mxu0
        %1613 = vmatprep.mubr.f32.mxu0 0.0
        %1614 = vmatmul.mubr.f32.gmra.mxu0 %v1542
        %v1615 = vpop.f32.mrf.mxu0
        %v1616 = vadd.f32 %v1537, %v1615
        %v1617 = vpop.f32.mrf.mxu0
        %1618 = vdwg.mxu0
        %v1619 = vld [vmem:[%s2 + $0x170] sm:$0xff]
        %v1620 = vld [vmem:[%s2 + $0x178] sm:$0xff]
        %v1621 = vld [vmem:[%s2 + $0x180] sm:$0xff]
        %v1622 = vld [vmem:[%s2 + $0x188] sm:$0xff]
        %v1623 = vld [vmem:[%s2 + $0x190] sm:$0xff]
        %v1624 = vld [vmem:[%s2 + $0x198] sm:$0xff]
        %v1625 = vld [vmem:[%s2 + $0x1a0] sm:$0xff]
        %v1626 = vld [vmem:[%s2 + $0x1a8] sm:$0xff]
        %v1627 = vld [vmem:[%s2 + $0x1b0] sm:$0xff]
        %v1628 = vld [vmem:[%s2 + $0x1b8] sm:$0xff]
        %v1629 = vld [vmem:[%s2 + $0x1c0] sm:$0xff]
        %v1630 = vld [vmem:[%s2 + $0x1c8] sm:$0xff]
        %v1631 = vld [vmem:[%s2 + $0x1d0] sm:$0xff]
        %v1632 = vld [vmem:[%s2 + $0x1d8] sm:$0xff]
        %v1633 = vld [vmem:[%s2 + $0x1e0] sm:$0xff]
        %v1634 = vld [vmem:[%s2 + $0x1e8] sm:$0xff]
        %v1635 = vld [vmem:[%s2 + $0x1f0] sm:$0xff]
        %v1636 = vld [vmem:[%s2 + $0x1f8] sm:$0xff]
        %v1637 = vld [vmem:[%s2 + $0x200] sm:$0xff]
        %v1638 = vld [vmem:[%s2 + $0x208] sm:$0xff]
        %v1639 = vld [vmem:[%s2 + $0x210] sm:$0xff]
        %v1640 = vld [vmem:[%s2 + $0x218] sm:$0xff]
        %v1641 = vld [vmem:[%s2 + $0x220] sm:$0xff]
        %v1642 = vld [vmem:[%s2 + $0x228] sm:$0xff]
        %v1643 = vld [vmem:[%s2 + $0x230] sm:$0xff]
        %v1644 = vld [vmem:[%s2 + $0x238] sm:$0xff]
        %v1645 = vld [vmem:[%s2 + $0x240] sm:$0xff]
        %v1646 = vld [vmem:[%s2 + $0x248] sm:$0xff]
        %v1647 = vld [vmem:[%s2 + $0x250] sm:$0xff]
        %v1648 = vld [vmem:[%s2 + $0x258] sm:$0xff]
        %v1649 = vld [vmem:[%s2 + $0x260] sm:$0xff]
        %v1650 = vld [vmem:[%s2 + $0x268] sm:$0xff]
        %v1651 = vmul.f32 %v1611, %v555
        %v1652 = vmul.f32 %v1616, %v557
        %v1653 = vmul.f32 %v1611, %v559
        %v1654 = vmul.f32 %v1616, %v561
        %v1655 = vmul.f32 %v1611, %v563
        %v1656 = vmul.f32 %v1616, %v565
        %v1657 = vmul.f32 %v1611, %v567
        %v1658 = vmul.f32 %v1616, %v569
        %v1660 = vsel %vm243, %v1611, 0
        %v1663 = vsel %vm243, %v1616, 0
        %v1666 = vsel %vm243, %v1619, 0
        %v1669 = vsel %vm243, %v1620, 0
        %v1672 = vsel %vm243, %v1621, 0
        %v1675 = vsel %vm243, %v1622, 0
        %v1678 = vsel %vm243, %v1623, 0
        %v1681 = vsel %vm243, %v1624, 0
        %v1684 = vsel %vm243, %v1625, 0
        %v1687 = vsel %vm243, %v1626, 0
        %1689 = vmatprep.subr.mxu0 0.0
        %1690 = vmatpush1.xpose.msra.mxu0 0.0
        %1691 = vmatprep.subr.mxu0 0.0
        %1692 = vmatpush1.xpose.msra.mxu0 0.0
        %1693 = vmatprep.subr.mxu0 0.0
        %1694 = vmatpush1.xpose.msra.mxu0 0.0
        %1695 = vmatprep.subr.mxu0 0.0
        %1696 = vmatpush1.xpose.msra.mxu0 0.0
        %1697 = vmatprep.subr.mxu0 0.0
        %1698 = vmatpush1.xpose.msra.mxu0 0.0
        %1699 = vmatprep.subr.mxu0 0.0
        %1700 = vmatpush1.xpose.msra.mxu0 0.0
        %1701 = vmatprep.subr.mxu0 0.0
        %1702 = vmatpush1.xpose.msra.mxu0 0.0
        %1703 = vmatprep.subr.mxu0 0.0
        %1704 = vmatpush1.xpose.msra.mxu0 0.0
        %1705 = vmatprep.subr.mxu0 0.0
        %1706 = vmatpush1.xpose.msra.mxu0 %v1687
        %1707 = vmatprep.subr.mxu0 0.0
        %1708 = vmatpush1.xpose.msra.mxu0 %v1684
        %1709 = vmatprep.subr.mxu0 0.0
        %1710 = vmatpush1.xpose.msra.mxu0 %v1681
        %1711 = vmatprep.subr.mxu0 0.0
        %1712 = vmatpush1.xpose.msra.mxu0 %v1678
        %1713 = vmatprep.subr.mxu0 0.0
        %1714 = vmatpush1.xpose.msra.mxu0 %v1675
        %1715 = vmatprep.subr.mxu0 0.0
        %1716 = vmatpush1.xpose.msra.mxu0 %v1672
        %1717 = vmatprep.subr.mxu0 0.0
        %1718 = vmatpush1.xpose.msra.mxu0 %v1669
        %1719 = vmatprep.subr.mxu0 0.0
        %1720 = vmatpush1.xpose.msra.mxu0 %v1666
        %1721 = vmatprep.subr.mxu0 0.0
        %1722 = vmatpush2.xpose.msra.mxu0 0.0
        %1723 = vmatprep.subr.mxu0 0.0
        %1724 = vmatpush2.xpose.msra.mxu0 0.0
        %1725 = vmatprep.subr.mxu0 0.0
        %1726 = vmatpush2.xpose.msra.mxu0 0.0
        %1727 = vmatprep.subr.mxu0 0.0
        %1728 = vmatpush2.xpose.msra.mxu0 0.0
        %1729 = vmatprep.subr.mxu0 0.0
        %1730 = vmatpush2.xpose.msra.mxu0 0.0
        %1731 = vmatprep.subr.mxu0 0.0
        %1732 = vmatpush2.xpose.msra.mxu0 0.0
        %1733 = vmatprep.subr.mxu0 0.0
        %1734 = vmatpush2.xpose.msra.mxu0 0.0
        %1735 = vmatprep.subr.mxu0 0.0
        %1736 = vmatpush2.xpose.msra.mxu0 0.0
        %1737 = vmatprep.subr.mxu0 0.0
        %1738 = vmatpush2.xpose.msra.mxu0 0.0
        %1739 = vmatprep.subr.mxu0 0.0
        %1740 = vmatpush2.xpose.msra.mxu0 0.0
        %1741 = vmatprep.subr.mxu0 0.0
        %1742 = vmatpush2.xpose.msra.mxu0 0.0
        %1743 = vmatprep.subr.mxu0 0.0
        %1744 = vmatpush2.xpose.msra.mxu0 0.0
        %1745 = vmatprep.subr.mxu0 0.0
        %1746 = vmatpush2.xpose.msra.mxu0 0.0
        %1747 = vmatprep.subr.mxu0 0.0
        %1748 = vmatpush2.xpose.msra.mxu0 0.0
        %1749 = vmatprep.subr.mxu0 0.0
        %1750 = vmatpush2.xpose.msra.mxu0 0.0
        %1751 = vmatprep.subr.mxu0 0.0
        %1752 = vmatpush2.xpose.msra.mxu0 0.0
        %1753 = vmatprep.mubr.f32.mxu0 0.0
        %1754 = vmatmul.mubr.f32.gmra.mxu0 %v1660
        %v1755 = vpop.f32.mrf.mxu0
        %v1756 = vadd.f32 0.0, %v1755
        %v1757 = vpop.f32.mrf.mxu0
        %1758 = vmatprep.mubr.f32.mxu0 0.0
        %1759 = vmatmul.mubr.f32.gmra.mxu0 %v1663
        %v1760 = vpop.f32.mrf.mxu0
        %v1761 = vadd.f32 0.0, %v1760
        %v1762 = vpop.f32.mrf.mxu0
        %1763 = vdwg.mxu0
        %v1764 = vmul.f32 %v1756, %v275
        %v1765 = vmul.f32 %v1761, %v276
        %1774 = vrot.lane.b32.xlu0 %v1651, 96
        %v1775 = vpop.permute.xlu0 %1774
        %1776 = vrot.lane.b32.xlu0 %v1652, 96
        %v1777 = vpop.permute.xlu0 %1776
        %1778 = vrot.lane.b32.xlu0 %v1653, 96
        %v1779 = vpop.permute.xlu0 %1778
        %1780 = vrot.lane.b32.xlu0 %v1654, 96
        %v1781 = vpop.permute.xlu0 %1780
        %1782 = vrot.lane.b32.xlu0 %v1655, 96
        %v1783 = vpop.permute.xlu0 %1782
        %1784 = vrot.lane.b32.xlu0 %v1656, 96
        %v1785 = vpop.permute.xlu0 %1784
        %1786 = vrot.lane.b32.xlu0 %v1657, 96
        %v1787 = vpop.permute.xlu0 %1786
        %1788 = vrot.lane.b32.xlu0 %v1658, 96
        %v1789 = vpop.permute.xlu0 %1788
        %v1790 = vsel %vm243, %v1775, 0
        %v1792 = vsel %vm243, %v1777, 0
        %v1794 = vsel %vm243, %v1779, 0
        %v1796 = vsel %vm243, %v1781, 0
        %v1798 = vsel %vm243, %v1783, 0
        %v1800 = vsel %vm243, %v1785, 0
        %v1802 = vsel %vm243, %v1787, 0
        %v1804 = vsel %vm243, %v1789, 0
        %1806 = vmatprep.subr.mxu0 0.0
        %1807 = vmatpush1.xpose.msra.mxu0 0.0
        %1808 = vmatprep.subr.mxu0 0.0
        %1809 = vmatpush1.xpose.msra.mxu0 0.0
        %1810 = vmatprep.subr.mxu0 0.0
        %1811 = vmatpush1.xpose.msra.mxu0 0.0
        %1812 = vmatprep.subr.mxu0 0.0
        %1813 = vmatpush1.xpose.msra.mxu0 0.0
        %1814 = vmatprep.subr.mxu0 0.0
        %1815 = vmatpush1.xpose.msra.mxu0 0.0
        %1816 = vmatprep.subr.mxu0 0.0
        %1817 = vmatpush1.xpose.msra.mxu0 0.0
        %1818 = vmatprep.subr.mxu0 0.0
        %1819 = vmatpush1.xpose.msra.mxu0 0.0
        %1820 = vmatprep.subr.mxu0 0.0
        %1821 = vmatpush1.xpose.msra.mxu0 0.0
        %1822 = vmatprep.subr.mxu0 0.0
        %1823 = vmatpush1.xpose.msra.mxu0 %v1804
        %1824 = vmatprep.subr.mxu0 0.0
        %1825 = vmatpush1.xpose.msra.mxu0 %v1802
        %1826 = vmatprep.subr.mxu0 0.0
        %1827 = vmatpush1.xpose.msra.mxu0 %v1800
        %1828 = vmatprep.subr.mxu0 0.0
        %1829 = vmatpush1.xpose.msra.mxu0 %v1798
        %1830 = vmatprep.subr.mxu0 0.0
        %1831 = vmatpush1.xpose.msra.mxu0 %v1796
        %1832 = vmatprep.subr.mxu0 0.0
        %1833 = vmatpush1.xpose.msra.mxu0 %v1794
        %1834 = vmatprep.subr.mxu0 0.0
        %1835 = vmatpush1.xpose.msra.mxu0 %v1792
        %1836 = vmatprep.subr.mxu0 0.0
        %1837 = vmatpush1.xpose.msra.mxu0 %v1790
        %1838 = vmatprep.subr.mxu0 0.0
        %1839 = vmatpush2.xpose.msra.mxu0 0.0
        %1840 = vmatprep.subr.mxu0 0.0
        %1841 = vmatpush2.xpose.msra.mxu0 0.0
        %1842 = vmatprep.subr.mxu0 0.0
        %1843 = vmatpush2.xpose.msra.mxu0 0.0
        %1844 = vmatprep.subr.mxu0 0.0
        %1845 = vmatpush2.xpose.msra.mxu0 0.0
        %1846 = vmatprep.subr.mxu0 0.0
        %1847 = vmatpush2.xpose.msra.mxu0 0.0
        %1848 = vmatprep.subr.mxu0 0.0
        %1849 = vmatpush2.xpose.msra.mxu0 0.0
        %1850 = vmatprep.subr.mxu0 0.0
        %1851 = vmatpush2.xpose.msra.mxu0 0.0
        %1852 = vmatprep.subr.mxu0 0.0
        %1853 = vmatpush2.xpose.msra.mxu0 0.0
        %1854 = vmatprep.subr.mxu0 0.0
        %1855 = vmatpush2.xpose.msra.mxu0 0.0
        %1856 = vmatprep.subr.mxu0 0.0
        %1857 = vmatpush2.xpose.msra.mxu0 0.0
        %1858 = vmatprep.subr.mxu0 0.0
        %1859 = vmatpush2.xpose.msra.mxu0 0.0
        %1860 = vmatprep.subr.mxu0 0.0
        %1861 = vmatpush2.xpose.msra.mxu0 0.0
        %1862 = vmatprep.subr.mxu0 0.0
        %1863 = vmatpush2.xpose.msra.mxu0 0.0
        %1864 = vmatprep.subr.mxu0 0.0
        %1865 = vmatpush2.xpose.msra.mxu0 0.0
        %1866 = vmatprep.subr.mxu0 0.0
        %1867 = vmatpush2.xpose.msra.mxu0 0.0
        %1868 = vmatprep.subr.mxu0 0.0
        %1869 = vmatpush2.xpose.msra.mxu0 0.0
        %1870 = vmatprep.mubr.f32.mxu0 0.0
        %1871 = vmatmul.mubr.f32.gmra.mxu0 %v1660
        %v1872 = vpop.f32.mrf.mxu0
        %v1873 = vadd.f32 %v1764, %v1872
        %v1874 = vpop.f32.mrf.mxu0
        %1875 = vmatprep.mubr.f32.mxu0 0.0
        %1876 = vmatmul.mubr.f32.gmra.mxu0 %v1663
        %v1877 = vpop.f32.mrf.mxu0
        %v1878 = vadd.f32 %v1765, %v1877
        %v1879 = vpop.f32.mrf.mxu0
        %1880 = vdwg.mxu0
        %v1882 = vsel %vm243, %v1627, 0
        %v1885 = vsel %vm243, %v1628, 0
        %v1888 = vsel %vm243, %v1629, 0
        %v1891 = vsel %vm243, %v1630, 0
        %v1894 = vsel %vm243, %v1631, 0
        %v1897 = vsel %vm243, %v1632, 0
        %v1900 = vsel %vm243, %v1633, 0
        %v1903 = vsel %vm243, %v1634, 0
        %1905 = vmatprep.subr.mxu0 0.0
        %1906 = vmatpush1.xpose.msra.mxu0 0.0
        %1907 = vmatprep.subr.mxu0 0.0
        %1908 = vmatpush1.xpose.msra.mxu0 0.0
        %1909 = vmatprep.subr.mxu0 0.0
        %1910 = vmatpush1.xpose.msra.mxu0 0.0
        %1911 = vmatprep.subr.mxu0 0.0
        %1912 = vmatpush1.xpose.msra.mxu0 0.0
        %1913 = vmatprep.subr.mxu0 0.0
        %1914 = vmatpush1.xpose.msra.mxu0 0.0
        %1915 = vmatprep.subr.mxu0 0.0
        %1916 = vmatpush1.xpose.msra.mxu0 0.0
        %1917 = vmatprep.subr.mxu0 0.0
        %1918 = vmatpush1.xpose.msra.mxu0 0.0
        %1919 = vmatprep.subr.mxu0 0.0
        %1920 = vmatpush1.xpose.msra.mxu0 0.0
        %1921 = vmatprep.subr.mxu0 0.0
        %1922 = vmatpush1.xpose.msra.mxu0 %v1903
        %1923 = vmatprep.subr.mxu0 0.0
        %1924 = vmatpush1.xpose.msra.mxu0 %v1900
        %1925 = vmatprep.subr.mxu0 0.0
        %1926 = vmatpush1.xpose.msra.mxu0 %v1897
        %1927 = vmatprep.subr.mxu0 0.0
        %1928 = vmatpush1.xpose.msra.mxu0 %v1894
        %1929 = vmatprep.subr.mxu0 0.0
        %1930 = vmatpush1.xpose.msra.mxu0 %v1891
        %1931 = vmatprep.subr.mxu0 0.0
        %1932 = vmatpush1.xpose.msra.mxu0 %v1888
        %1933 = vmatprep.subr.mxu0 0.0
        %1934 = vmatpush1.xpose.msra.mxu0 %v1885
        %1935 = vmatprep.subr.mxu0 0.0
        %1936 = vmatpush1.xpose.msra.mxu0 %v1882
        %1937 = vmatprep.subr.mxu0 0.0
        %1938 = vmatpush2.xpose.msra.mxu0 0.0
        %1939 = vmatprep.subr.mxu0 0.0
        %1940 = vmatpush2.xpose.msra.mxu0 0.0
        %1941 = vmatprep.subr.mxu0 0.0
        %1942 = vmatpush2.xpose.msra.mxu0 0.0
        %1943 = vmatprep.subr.mxu0 0.0
        %1944 = vmatpush2.xpose.msra.mxu0 0.0
        %1945 = vmatprep.subr.mxu0 0.0
        %1946 = vmatpush2.xpose.msra.mxu0 0.0
        %1947 = vmatprep.subr.mxu0 0.0
        %1948 = vmatpush2.xpose.msra.mxu0 0.0
        %1949 = vmatprep.subr.mxu0 0.0
        %1950 = vmatpush2.xpose.msra.mxu0 0.0
        %1951 = vmatprep.subr.mxu0 0.0
        %1952 = vmatpush2.xpose.msra.mxu0 0.0
        %1953 = vmatprep.subr.mxu0 0.0
        %1954 = vmatpush2.xpose.msra.mxu0 0.0
        %1955 = vmatprep.subr.mxu0 0.0
        %1956 = vmatpush2.xpose.msra.mxu0 0.0
        %1957 = vmatprep.subr.mxu0 0.0
        %1958 = vmatpush2.xpose.msra.mxu0 0.0
        %1959 = vmatprep.subr.mxu0 0.0
        %1960 = vmatpush2.xpose.msra.mxu0 0.0
        %1961 = vmatprep.subr.mxu0 0.0
        %1962 = vmatpush2.xpose.msra.mxu0 0.0
        %1963 = vmatprep.subr.mxu0 0.0
        %1964 = vmatpush2.xpose.msra.mxu0 0.0
        %1965 = vmatprep.subr.mxu0 0.0
        %1966 = vmatpush2.xpose.msra.mxu0 0.0
        %1967 = vmatprep.subr.mxu0 0.0
        %1968 = vmatpush2.xpose.msra.mxu0 0.0
        %1969 = vmatprep.mubr.f32.mxu0 0.0
        %1970 = vmatmul.mubr.f32.gmra.mxu0 %v1660
        %v1971 = vpop.f32.mrf.mxu0
        %v1972 = vadd.f32 0.0, %v1971
        %v1973 = vpop.f32.mrf.mxu0
        %1974 = vmatprep.mubr.f32.mxu0 0.0
        %1975 = vmatmul.mubr.f32.gmra.mxu0 %v1663
        %v1976 = vpop.f32.mrf.mxu0
        %v1977 = vadd.f32 0.0, %v1976
        %v1978 = vpop.f32.mrf.mxu0
        %1979 = vdwg.mxu0
        %v1980 = vmul.f32 %v1972, %v303
        %v1981 = vmul.f32 %v1977, %v304
        %v1982 = vadd.f32 %v1873, %v1980
        %v1983 = vadd.f32 %v1878, %v1981
        %v1985 = vsel %vm243, %v1635, 0
        %v1988 = vsel %vm243, %v1636, 0
        %v1991 = vsel %vm243, %v1637, 0
        %v1994 = vsel %vm243, %v1638, 0
        %v1997 = vsel %vm243, %v1639, 0
        %v2000 = vsel %vm243, %v1640, 0
        %v2003 = vsel %vm243, %v1641, 0
        %v2006 = vsel %vm243, %v1642, 0
        %2008 = vmatprep.subr.mxu0 0.0
        %2009 = vmatpush1.xpose.msra.mxu0 0.0
        %2010 = vmatprep.subr.mxu0 0.0
        %2011 = vmatpush1.xpose.msra.mxu0 0.0
        %2012 = vmatprep.subr.mxu0 0.0
        %2013 = vmatpush1.xpose.msra.mxu0 0.0
        %2014 = vmatprep.subr.mxu0 0.0
        %2015 = vmatpush1.xpose.msra.mxu0 0.0
        %2016 = vmatprep.subr.mxu0 0.0
        %2017 = vmatpush1.xpose.msra.mxu0 0.0
        %2018 = vmatprep.subr.mxu0 0.0
        %2019 = vmatpush1.xpose.msra.mxu0 0.0
        %2020 = vmatprep.subr.mxu0 0.0
        %2021 = vmatpush1.xpose.msra.mxu0 0.0
        %2022 = vmatprep.subr.mxu0 0.0
        %2023 = vmatpush1.xpose.msra.mxu0 0.0
        %2024 = vmatprep.subr.mxu0 0.0
        %2025 = vmatpush1.xpose.msra.mxu0 %v2006
        %2026 = vmatprep.subr.mxu0 0.0
        %2027 = vmatpush1.xpose.msra.mxu0 %v2003
        %2028 = vmatprep.subr.mxu0 0.0
        %2029 = vmatpush1.xpose.msra.mxu0 %v2000
        %2030 = vmatprep.subr.mxu0 0.0
        %2031 = vmatpush1.xpose.msra.mxu0 %v1997
        %2032 = vmatprep.subr.mxu0 0.0
        %2033 = vmatpush1.xpose.msra.mxu0 %v1994
        %2034 = vmatprep.subr.mxu0 0.0
        %2035 = vmatpush1.xpose.msra.mxu0 %v1991
        %2036 = vmatprep.subr.mxu0 0.0
        %2037 = vmatpush1.xpose.msra.mxu0 %v1988
        %2038 = vmatprep.subr.mxu0 0.0
        %2039 = vmatpush1.xpose.msra.mxu0 %v1985
        %2040 = vmatprep.subr.mxu0 0.0
        %2041 = vmatpush2.xpose.msra.mxu0 0.0
        %2042 = vmatprep.subr.mxu0 0.0
        %2043 = vmatpush2.xpose.msra.mxu0 0.0
        %2044 = vmatprep.subr.mxu0 0.0
        %2045 = vmatpush2.xpose.msra.mxu0 0.0
        %2046 = vmatprep.subr.mxu0 0.0
        %2047 = vmatpush2.xpose.msra.mxu0 0.0
        %2048 = vmatprep.subr.mxu0 0.0
        %2049 = vmatpush2.xpose.msra.mxu0 0.0
        %2050 = vmatprep.subr.mxu0 0.0
        %2051 = vmatpush2.xpose.msra.mxu0 0.0
        %2052 = vmatprep.subr.mxu0 0.0
        %2053 = vmatpush2.xpose.msra.mxu0 0.0
        %2054 = vmatprep.subr.mxu0 0.0
        %2055 = vmatpush2.xpose.msra.mxu0 0.0
        %2056 = vmatprep.subr.mxu0 0.0
        %2057 = vmatpush2.xpose.msra.mxu0 0.0
        %2058 = vmatprep.subr.mxu0 0.0
        %2059 = vmatpush2.xpose.msra.mxu0 0.0
        %2060 = vmatprep.subr.mxu0 0.0
        %2061 = vmatpush2.xpose.msra.mxu0 0.0
        %2062 = vmatprep.subr.mxu0 0.0
        %2063 = vmatpush2.xpose.msra.mxu0 0.0
        %2064 = vmatprep.subr.mxu0 0.0
        %2065 = vmatpush2.xpose.msra.mxu0 0.0
        %2066 = vmatprep.subr.mxu0 0.0
        %2067 = vmatpush2.xpose.msra.mxu0 0.0
        %2068 = vmatprep.subr.mxu0 0.0
        %2069 = vmatpush2.xpose.msra.mxu0 0.0
        %2070 = vmatprep.subr.mxu0 0.0
        %2071 = vmatpush2.xpose.msra.mxu0 0.0
        %2072 = vmatprep.mubr.f32.mxu0 0.0
        %2073 = vmatmul.mubr.f32.gmra.mxu0 %v1660
        %v2074 = vpop.f32.mrf.mxu0
        %v2075 = vadd.f32 0.0, %v2074
        %v2076 = vpop.f32.mrf.mxu0
        %2077 = vmatprep.mubr.f32.mxu0 0.0
        %2078 = vmatmul.mubr.f32.gmra.mxu0 %v1663
        %v2079 = vpop.f32.mrf.mxu0
        %v2080 = vadd.f32 0.0, %v2079
        %v2081 = vpop.f32.mrf.mxu0
        %2082 = vdwg.mxu0
        %v2083 = vmul.f32 %v2075, %v331
        %v2084 = vmul.f32 %v2080, %v332
        %v2085 = vadd.f32 %v1982, %v2083
        %v2086 = vadd.f32 %v1983, %v2084
        %v2088 = vsel %vm243, %v1643, 0
        %v2091 = vsel %vm243, %v1644, 0
        %v2094 = vsel %vm243, %v1645, 0
        %v2097 = vsel %vm243, %v1646, 0
        %v2100 = vsel %vm243, %v1647, 0
        %v2103 = vsel %vm243, %v1648, 0
        %v2106 = vsel %vm243, %v1649, 0
        %v2109 = vsel %vm243, %v1650, 0
        %2111 = vmatprep.subr.mxu0 0.0
        %2112 = vmatpush1.xpose.msra.mxu0 0.0
        %2113 = vmatprep.subr.mxu0 0.0
        %2114 = vmatpush1.xpose.msra.mxu0 0.0
        %2115 = vmatprep.subr.mxu0 0.0
        %2116 = vmatpush1.xpose.msra.mxu0 0.0
        %2117 = vmatprep.subr.mxu0 0.0
        %2118 = vmatpush1.xpose.msra.mxu0 0.0
        %2119 = vmatprep.subr.mxu0 0.0
        %2120 = vmatpush1.xpose.msra.mxu0 0.0
        %2121 = vmatprep.subr.mxu0 0.0
        %2122 = vmatpush1.xpose.msra.mxu0 0.0
        %2123 = vmatprep.subr.mxu0 0.0
        %2124 = vmatpush1.xpose.msra.mxu0 0.0
        %2125 = vmatprep.subr.mxu0 0.0
        %2126 = vmatpush1.xpose.msra.mxu0 0.0
        %2127 = vmatprep.subr.mxu0 0.0
        %2128 = vmatpush1.xpose.msra.mxu0 %v2109
        %2129 = vmatprep.subr.mxu0 0.0
        %2130 = vmatpush1.xpose.msra.mxu0 %v2106
        %2131 = vmatprep.subr.mxu0 0.0
        %2132 = vmatpush1.xpose.msra.mxu0 %v2103
        %2133 = vmatprep.subr.mxu0 0.0
        %2134 = vmatpush1.xpose.msra.mxu0 %v2100
        %2135 = vmatprep.subr.mxu0 0.0
        %2136 = vmatpush1.xpose.msra.mxu0 %v2097
        %2137 = vmatprep.subr.mxu0 0.0
        %2138 = vmatpush1.xpose.msra.mxu0 %v2094
        %2139 = vmatprep.subr.mxu0 0.0
        %2140 = vmatpush1.xpose.msra.mxu0 %v2091
        %2141 = vmatprep.subr.mxu0 0.0
        %2142 = vmatpush1.xpose.msra.mxu0 %v2088
        %2143 = vmatprep.subr.mxu0 0.0
        %2144 = vmatpush2.xpose.msra.mxu0 0.0
        %2145 = vmatprep.subr.mxu0 0.0
        %2146 = vmatpush2.xpose.msra.mxu0 0.0
        %2147 = vmatprep.subr.mxu0 0.0
        %2148 = vmatpush2.xpose.msra.mxu0 0.0
        %2149 = vmatprep.subr.mxu0 0.0
        %2150 = vmatpush2.xpose.msra.mxu0 0.0
        %2151 = vmatprep.subr.mxu0 0.0
        %2152 = vmatpush2.xpose.msra.mxu0 0.0
        %2153 = vmatprep.subr.mxu0 0.0
        %2154 = vmatpush2.xpose.msra.mxu0 0.0
        %2155 = vmatprep.subr.mxu0 0.0
        %2156 = vmatpush2.xpose.msra.mxu0 0.0
        %2157 = vmatprep.subr.mxu0 0.0
        %2158 = vmatpush2.xpose.msra.mxu0 0.0
        %2159 = vmatprep.subr.mxu0 0.0
        %2160 = vmatpush2.xpose.msra.mxu0 0.0
        %2161 = vmatprep.subr.mxu0 0.0
        %2162 = vmatpush2.xpose.msra.mxu0 0.0
        %2163 = vmatprep.subr.mxu0 0.0
        %2164 = vmatpush2.xpose.msra.mxu0 0.0
        %2165 = vmatprep.subr.mxu0 0.0
        %2166 = vmatpush2.xpose.msra.mxu0 0.0
        %2167 = vmatprep.subr.mxu0 0.0
        %2168 = vmatpush2.xpose.msra.mxu0 0.0
        %2169 = vmatprep.subr.mxu0 0.0
        %2170 = vmatpush2.xpose.msra.mxu0 0.0
        %2171 = vmatprep.subr.mxu0 0.0
        %2172 = vmatpush2.xpose.msra.mxu0 0.0
        %2173 = vmatprep.subr.mxu0 0.0
        %2174 = vmatpush2.xpose.msra.mxu0 0.0
        %2175 = vmatprep.mubr.f32.mxu0 0.0
        %2176 = vmatmul.mubr.f32.gmra.mxu0 %v1660
        %v2177 = vpop.f32.mrf.mxu0
        %v2178 = vadd.f32 0.0, %v2177
        %v2179 = vpop.f32.mrf.mxu0
        %2180 = vmatprep.mubr.f32.mxu0 0.0
        %2181 = vmatmul.mubr.f32.gmra.mxu0 %v1663
        %v2182 = vpop.f32.mrf.mxu0
        %v2183 = vadd.f32 0.0, %v2182
        %v2184 = vpop.f32.mrf.mxu0
        %2185 = vdwg.mxu0
        %v2186 = vmul.f32 %v2178, %v359
        %v2187 = vmul.f32 %v2183, %v360
        %v2188 = vadd.f32 %v2085, %v2186
        %v2189 = vadd.f32 %v2086, %v2187
        %v2190 = vsel %vm1117, %v2188, -1e+30
        %v2191 = vsel %vm1118, %v2189, -1e+30
        %v2192 = vsel %vm1121, %v2190, -inf
        %2193 = vmax.xlane.f32.xlu0 %v2192
        %v2194 = vpop.xlane.xlu0 %2193
        %v2195 = vsel %vm1121, %v2191, -inf
        %2196 = vmax.xlane.f32.xlu0 %v2195
        %v2197 = vpop.xlane.xlu0 %2196
        %v2198 = vsub.f32 %v2190, %v2194
        %v2199 = vsub.f32 %v2191, %v2197
        %v2200 = vmul.f32 %v2198, 1.442695
        %v2201 = vpow.pop %v2200
        %v2202 = vmul.f32 %v2199, 1.442695
        %v2203 = vpow.pop %v2202
        %v2204 = vmul.f32 %v2201, %v247
        %v2205 = vmul.f32 %v2203, %v248
        %v2207 = vsel %vm1121, %v2204, 0
        %v2210 = vsel %vm1121, %v2205, 0
        %2212 = vmatprep.subr.mxu0 0.0
        %2213 = vmatpush1.msra.mxu0 0.0
        %2214 = vmatprep.subr.mxu0 0.0
        %2215 = vmatpush1.msra.mxu0 0.0
        %2216 = vmatprep.subr.mxu0 0.0
        %2217 = vmatpush1.msra.mxu0 0.0
        %2218 = vmatprep.subr.mxu0 0.0
        %2219 = vmatpush1.msra.mxu0 0.0
        %2220 = vmatprep.subr.mxu0 0.0
        %2221 = vmatpush1.msra.mxu0 0.0
        %2222 = vmatprep.subr.mxu0 0.0
        %2223 = vmatpush1.msra.mxu0 0.0
        %2224 = vmatprep.subr.mxu0 0.0
        %2225 = vmatpush1.msra.mxu0 0.0
        %2226 = vmatprep.subr.mxu0 0.0
        %2227 = vmatpush1.msra.mxu0 0.0
        %2228 = vmatprep.subr.mxu0 0.0
        %2229 = vmatpush1.msra.mxu0 %v368
        %2230 = vmatprep.subr.mxu0 0.0
        %2231 = vmatpush1.msra.mxu0 %v367
        %2232 = vmatprep.subr.mxu0 0.0
        %2233 = vmatpush1.msra.mxu0 %v366
        %2234 = vmatprep.subr.mxu0 0.0
        %2235 = vmatpush1.msra.mxu0 %v365
        %2236 = vmatprep.subr.mxu0 0.0
        %2237 = vmatpush1.msra.mxu0 %v364
        %2238 = vmatprep.subr.mxu0 0.0
        %2239 = vmatpush1.msra.mxu0 %v363
        %2240 = vmatprep.subr.mxu0 0.0
        %2241 = vmatpush1.msra.mxu0 %v362
        %2242 = vmatprep.subr.mxu0 0.0
        %2243 = vmatpush1.msra.mxu0 %v361
        %2244 = vmatprep.subr.mxu0 0.0
        %2245 = vmatpush2.msra.mxu0 0.0
        %2246 = vmatprep.subr.mxu0 0.0
        %2247 = vmatpush2.msra.mxu0 0.0
        %2248 = vmatprep.subr.mxu0 0.0
        %2249 = vmatpush2.msra.mxu0 0.0
        %2250 = vmatprep.subr.mxu0 0.0
        %2251 = vmatpush2.msra.mxu0 0.0
        %2252 = vmatprep.subr.mxu0 0.0
        %2253 = vmatpush2.msra.mxu0 0.0
        %2254 = vmatprep.subr.mxu0 0.0
        %2255 = vmatpush2.msra.mxu0 0.0
        %2256 = vmatprep.subr.mxu0 0.0
        %2257 = vmatpush2.msra.mxu0 0.0
        %2258 = vmatprep.subr.mxu0 0.0
        %2259 = vmatpush2.msra.mxu0 0.0
        %2260 = vmatprep.subr.mxu0 0.0
        %2261 = vmatpush2.msra.mxu0 0.0
        %2262 = vmatprep.subr.mxu0 0.0
        %2263 = vmatpush2.msra.mxu0 0.0
        %2264 = vmatprep.subr.mxu0 0.0
        %2265 = vmatpush2.msra.mxu0 0.0
        %2266 = vmatprep.subr.mxu0 0.0
        %2267 = vmatpush2.msra.mxu0 0.0
        %2268 = vmatprep.subr.mxu0 0.0
        %2269 = vmatpush2.msra.mxu0 0.0
        %2270 = vmatprep.subr.mxu0 0.0
        %2271 = vmatpush2.msra.mxu0 0.0
        %2272 = vmatprep.subr.mxu0 0.0
        %2273 = vmatpush2.msra.mxu0 0.0
        %2274 = vmatprep.subr.mxu0 0.0
        %2275 = vmatpush2.msra.mxu0 0.0
        %2276 = vmatprep.mubr.f32.mxu0 0.0
        %2277 = vmatmul.mubr.f32.gmra.mxu0 %v2207
        %v2278 = vpop.f32.mrf.mxu0
        %v2279 = vadd.f32 0.0, %v2278
        %v2280 = vpop.f32.mrf.mxu0
        %2281 = vmatprep.mubr.f32.mxu0 0.0
        %2282 = vmatmul.mubr.f32.gmra.mxu0 %v2210
        %v2283 = vpop.f32.mrf.mxu0
        %v2284 = vadd.f32 0.0, %v2283
        %v2285 = vpop.f32.mrf.mxu0
        %2286 = vdwg.mxu0
        %v2287 = vmax.f32 %v2279, 1e-30
        %v2288 = vmax.f32 %v2284, 1e-30
        %v2289 = vrcp.pop %v2287
        %v2290 = vrcp.pop %v2288
        %v2291 = vmul.f32 %v1611, %v1222
        %v2292 = vmul.f32 %v1616, %v1224
        %v2293 = vmul.f32 %v1611, %v1226
        %v2294 = vmul.f32 %v1616, %v1228
        %v2295 = vmul.f32 %v1611, %v1230
        %v2296 = vmul.f32 %v1616, %v1232
        %v2297 = vmul.f32 %v1611, %v1234
        %v2298 = vmul.f32 %v1616, %v1236
        %v2299 = vmul.f32 %v2204, %v275
        %v2300 = vmul.f32 %v2205, %v276
        %v2301 = vmul.f32 %v2204, %v303
        %v2302 = vmul.f32 %v2205, %v304
        %v2303 = vmul.f32 %v2204, %v331
        %v2304 = vmul.f32 %v2205, %v332
        %v2305 = vmul.f32 %v2204, %v359
        %v2306 = vmul.f32 %v2205, %v360
        %2309 = vrot.lane.b32.xlu0 %v2301, 64
        %v2310 = vpop.permute.xlu0 %2309
        %2311 = vrot.lane.b32.xlu0 %v2302, 64
        %v2312 = vpop.permute.xlu0 %2311
        %2317 = vrot.lane.b32.xlu0 %v2305, 64
        %v2318 = vpop.permute.xlu0 %2317
        %2319 = vrot.lane.b32.xlu0 %v2306, 64
        %v2320 = vpop.permute.xlu0 %2319
        %v2323 = vsel %vm1121, %v2299, %v2310
        %v2324 = vsel %vm1121, %v2300, %v2312
        %v2325 = vsel %vm1121, %v2303, %v2318
        %v2326 = vsel %vm1121, %v2304, %v2320
        %2327 = vmatprep.subr.mxu0 0.0
        %2328 = vmatpush1.msra.mxu0 %v1634
        %2329 = vmatprep.subr.mxu0 0.0
        %2330 = vmatpush1.msra.mxu0 %v1633
        %2331 = vmatprep.subr.mxu0 0.0
        %2332 = vmatpush1.msra.mxu0 %v1632
        %2333 = vmatprep.subr.mxu0 0.0
        %2334 = vmatpush1.msra.mxu0 %v1631
        %2335 = vmatprep.subr.mxu0 0.0
        %2336 = vmatpush1.msra.mxu0 %v1630
        %2337 = vmatprep.subr.mxu0 0.0
        %2338 = vmatpush1.msra.mxu0 %v1629
        %2339 = vmatprep.subr.mxu0 0.0
        %2340 = vmatpush1.msra.mxu0 %v1628
        %2341 = vmatprep.subr.mxu0 0.0
        %2342 = vmatpush1.msra.mxu0 %v1627
        %2343 = vmatprep.subr.mxu0 0.0
        %2344 = vmatpush1.msra.mxu0 %v1626
        %2345 = vmatprep.subr.mxu0 0.0
        %2346 = vmatpush1.msra.mxu0 %v1625
        %2347 = vmatprep.subr.mxu0 0.0
        %2348 = vmatpush1.msra.mxu0 %v1624
        %2349 = vmatprep.subr.mxu0 0.0
        %2350 = vmatpush1.msra.mxu0 %v1623
        %2351 = vmatprep.subr.mxu0 0.0
        %2352 = vmatpush1.msra.mxu0 %v1622
        %2353 = vmatprep.subr.mxu0 0.0
        %2354 = vmatpush1.msra.mxu0 %v1621
        %2355 = vmatprep.subr.mxu0 0.0
        %2356 = vmatpush1.msra.mxu0 %v1620
        %2357 = vmatprep.subr.mxu0 0.0
        %2358 = vmatpush1.msra.mxu0 %v1619
        %2359 = vmatprep.subr.mxu0 0.0
        %2360 = vmatpush2.msra.mxu0 %v1650
        %2361 = vmatprep.subr.mxu0 0.0
        %2362 = vmatpush2.msra.mxu0 %v1649
        %2363 = vmatprep.subr.mxu0 0.0
        %2364 = vmatpush2.msra.mxu0 %v1648
        %2365 = vmatprep.subr.mxu0 0.0
        %2366 = vmatpush2.msra.mxu0 %v1647
        %2367 = vmatprep.subr.mxu0 0.0
        %2368 = vmatpush2.msra.mxu0 %v1646
        %2369 = vmatprep.subr.mxu0 0.0
        %2370 = vmatpush2.msra.mxu0 %v1645
        %2371 = vmatprep.subr.mxu0 0.0
        %2372 = vmatpush2.msra.mxu0 %v1644
        %2373 = vmatprep.subr.mxu0 0.0
        %2374 = vmatpush2.msra.mxu0 %v1643
        %2375 = vmatprep.subr.mxu0 0.0
        %2376 = vmatpush2.msra.mxu0 %v1642
        %2377 = vmatprep.subr.mxu0 0.0
        %2378 = vmatpush2.msra.mxu0 %v1641
        %2379 = vmatprep.subr.mxu0 0.0
        %2380 = vmatpush2.msra.mxu0 %v1640
        %2381 = vmatprep.subr.mxu0 0.0
        %2382 = vmatpush2.msra.mxu0 %v1639
        %2383 = vmatprep.subr.mxu0 0.0
        %2384 = vmatpush2.msra.mxu0 %v1638
        %2385 = vmatprep.subr.mxu0 0.0
        %2386 = vmatpush2.msra.mxu0 %v1637
        %2387 = vmatprep.subr.mxu0 0.0
        %2388 = vmatpush2.msra.mxu0 %v1636
        %2389 = vmatprep.subr.mxu0 0.0
        %2390 = vmatpush2.msra.mxu0 %v1635
        %2391 = vmatprep.mubr.f32.mxu0 %v2325
        %2392 = vmatmul.mubr.f32.gmra.mxu0 %v2323
        %v2393 = vpop.f32.mrf.mxu0
        %v2394 = vadd.f32 0.0, %v2393
        %v2395 = vpop.f32.mrf.mxu0
        %2396 = vmatprep.mubr.f32.mxu0 %v2326
        %2397 = vmatmul.mubr.f32.gmra.mxu0 %v2324
        %v2398 = vpop.f32.mrf.mxu0
        %v2399 = vadd.f32 0.0, %v2398
        %v2400 = vpop.f32.mrf.mxu0
        %2401 = vdwg.mxu0
        %2410 = vrot.lane.b32.xlu0 %v2291, 64
        %v2411 = vpop.permute.xlu0 %2410
        %2412 = vrot.lane.b32.xlu0 %v2292, 64
        %v2413 = vpop.permute.xlu0 %2412
        %2414 = vrot.lane.b32.xlu0 %v2293, 64
        %v2415 = vpop.permute.xlu0 %2414
        %2416 = vrot.lane.b32.xlu0 %v2294, 64
        %v2417 = vpop.permute.xlu0 %2416
        %2418 = vrot.lane.b32.xlu0 %v2295, 64
        %v2419 = vpop.permute.xlu0 %2418
        %2420 = vrot.lane.b32.xlu0 %v2296, 64
        %v2421 = vpop.permute.xlu0 %2420
        %2422 = vrot.lane.b32.xlu0 %v2297, 64
        %v2423 = vpop.permute.xlu0 %2422
        %2424 = vrot.lane.b32.xlu0 %v2298, 64
        %v2425 = vpop.permute.xlu0 %2424
        %2434 = vmatprep.subr.mxu0 0.0
        %2435 = vmatpush1.msra.mxu0 0.0
        %2436 = vmatprep.subr.mxu0 0.0
        %2437 = vmatpush1.msra.mxu0 0.0
        %2438 = vmatprep.subr.mxu0 0.0
        %2439 = vmatpush1.msra.mxu0 0.0
        %2440 = vmatprep.subr.mxu0 0.0
        %2441 = vmatpush1.msra.mxu0 0.0
        %2442 = vmatprep.subr.mxu0 0.0
        %2443 = vmatpush1.msra.mxu0 0.0
        %2444 = vmatprep.subr.mxu0 0.0
        %2445 = vmatpush1.msra.mxu0 0.0
        %2446 = vmatprep.subr.mxu0 0.0
        %2447 = vmatpush1.msra.mxu0 0.0
        %2448 = vmatprep.subr.mxu0 0.0
        %2449 = vmatpush1.msra.mxu0 0.0
        %2450 = vmatprep.subr.mxu0 0.0
        %2451 = vmatpush1.msra.mxu0 %v2425
        %2452 = vmatprep.subr.mxu0 0.0
        %2453 = vmatpush1.msra.mxu0 %v2423
        %2454 = vmatprep.subr.mxu0 0.0
        %2455 = vmatpush1.msra.mxu0 %v2421
        %2456 = vmatprep.subr.mxu0 0.0
        %2457 = vmatpush1.msra.mxu0 %v2419
        %2458 = vmatprep.subr.mxu0 0.0
        %2459 = vmatpush1.msra.mxu0 %v2417
        %2460 = vmatprep.subr.mxu0 0.0
        %2461 = vmatpush1.msra.mxu0 %v2415
        %2462 = vmatprep.subr.mxu0 0.0
        %2463 = vmatpush1.msra.mxu0 %v2413
        %2464 = vmatprep.subr.mxu0 0.0
        %2465 = vmatpush1.msra.mxu0 %v2411
        %2466 = vmatprep.subr.mxu0 0.0
        %2467 = vmatpush2.msra.mxu0 0.0
        %2468 = vmatprep.subr.mxu0 0.0
        %2469 = vmatpush2.msra.mxu0 0.0
        %2470 = vmatprep.subr.mxu0 0.0
        %2471 = vmatpush2.msra.mxu0 0.0
        %2472 = vmatprep.subr.mxu0 0.0
        %2473 = vmatpush2.msra.mxu0 0.0
        %2474 = vmatprep.subr.mxu0 0.0
        %2475 = vmatpush2.msra.mxu0 0.0
        %2476 = vmatprep.subr.mxu0 0.0
        %2477 = vmatpush2.msra.mxu0 0.0
        %2478 = vmatprep.subr.mxu0 0.0
        %2479 = vmatpush2.msra.mxu0 0.0
        %2480 = vmatprep.subr.mxu0 0.0
        %2481 = vmatpush2.msra.mxu0 0.0
        %2482 = vmatprep.subr.mxu0 0.0
        %2483 = vmatpush2.msra.mxu0 0.0
        %2484 = vmatprep.subr.mxu0 0.0
        %2485 = vmatpush2.msra.mxu0 0.0
        %2486 = vmatprep.subr.mxu0 0.0
        %2487 = vmatpush2.msra.mxu0 0.0
        %2488 = vmatprep.subr.mxu0 0.0
        %2489 = vmatpush2.msra.mxu0 0.0
        %2490 = vmatprep.subr.mxu0 0.0
        %2491 = vmatpush2.msra.mxu0 0.0
        %2492 = vmatprep.subr.mxu0 0.0
        %2493 = vmatpush2.msra.mxu0 0.0
        %2494 = vmatprep.subr.mxu0 0.0
        %2495 = vmatpush2.msra.mxu0 0.0
        %2496 = vmatprep.subr.mxu0 0.0
        %2497 = vmatpush2.msra.mxu0 0.0
        %2498 = vmatprep.mubr.f32.mxu0 0.0
        %2499 = vmatmul.mubr.f32.gmra.mxu0 %v2207
        %v2500 = vpop.f32.mrf.mxu0
        %v2501 = vadd.f32 %v2394, %v2500
        %v2502 = vpop.f32.mrf.mxu0
        %2503 = vmatprep.mubr.f32.mxu0 0.0
        %2504 = vmatmul.mubr.f32.gmra.mxu0 %v2210
        %v2505 = vpop.f32.mrf.mxu0
        %v2506 = vadd.f32 %v2399, %v2505
        %v2507 = vpop.f32.mrf.mxu0
        %2508 = vdwg.mxu0
        %v2509 = vmul.f32 %v2501, %v2289
        %v2510 = vmul.f32 %v2506, %v2290
        %v2511 = vadd.f32 %v1473, %v2509
        %v2512 = vadd.f32 %v1474, %v2510
        %2513 = vrot.lane.b32.xlu0 %v1611, 32
        %v2514 = vpop.permute.xlu0 %2513
        %2515 = vrot.lane.b32.xlu0 %v1616, 32
        %v2516 = vpop.permute.xlu0 %2515
        %v2519 = vadd.f32 %v2511, %v2514
        %v2520 = vadd.f32 %v2512, %v2516
        %v2521 = vld [vmem:[%s2 + $0x48] sm:$0xff]
        %v2522 = vld [vmem:[%s2 + $0x50] sm:$0xff]
        %v2523 = vld [vmem:[%s2 + $0x58] sm:$0xff]
        %v2524 = vld [vmem:[%s2 + $0x60] sm:$0xff]
        %v2525 = vld [vmem:[%s2 + $0x68] sm:$0x1]
        %v2526 = vlaneseq
        %v2527 = vshrl.u32 %v2526, 7
        %v2528 = vsub.s32 0, %v2527
        %v2529 = vrot.slane %v2525, %v2528
        %v2531 = vsel %vm243, %v2519, 0
        %v2534 = vsel %vm243, %v2520, 0
        %2536 = vmatprep.subr.mxu0 0.0
        %2537 = vmatpush1.msra.mxu0 0.0
        %2538 = vmatprep.subr.mxu0 0.0
        %2539 = vmatpush1.msra.mxu0 0.0
        %2540 = vmatprep.subr.mxu0 0.0
        %2541 = vmatpush1.msra.mxu0 0.0
        %2542 = vmatprep.subr.mxu0 0.0
        %2543 = vmatpush1.msra.mxu0 0.0
        %2544 = vmatprep.subr.mxu0 0.0
        %2545 = vmatpush1.msra.mxu0 0.0
        %2546 = vmatprep.subr.mxu0 0.0
        %2547 = vmatpush1.msra.mxu0 0.0
        %2548 = vmatprep.subr.mxu0 0.0
        %2549 = vmatpush1.msra.mxu0 0.0
        %2550 = vmatprep.subr.mxu0 0.0
        %2551 = vmatpush1.msra.mxu0 0.0
        %2552 = vmatprep.subr.mxu0 0.0
        %2553 = vmatpush1.msra.mxu0 0.0
        %2554 = vmatprep.subr.mxu0 0.0
        %2555 = vmatpush1.msra.mxu0 0.0
        %2556 = vmatprep.subr.mxu0 0.0
        %2557 = vmatpush1.msra.mxu0 0.0
        %2558 = vmatprep.subr.mxu0 0.0
        %2559 = vmatpush1.msra.mxu0 0.0
        %2560 = vmatprep.subr.mxu0 0.0
        %2561 = vmatpush1.msra.mxu0 %v2524
        %2562 = vmatprep.subr.mxu0 0.0
        %2563 = vmatpush1.msra.mxu0 %v2523
        %2564 = vmatprep.subr.mxu0 0.0
        %2565 = vmatpush1.msra.mxu0 %v2522
        %2566 = vmatprep.subr.mxu0 0.0
        %2567 = vmatpush1.msra.mxu0 %v2521
        %2568 = vmatprep.subr.mxu0 0.0
        %2569 = vmatpush2.msra.mxu0 0.0
        %2570 = vmatprep.subr.mxu0 0.0
        %2571 = vmatpush2.msra.mxu0 0.0
        %2572 = vmatprep.subr.mxu0 0.0
        %2573 = vmatpush2.msra.mxu0 0.0
        %2574 = vmatprep.subr.mxu0 0.0
        %2575 = vmatpush2.msra.mxu0 0.0
        %2576 = vmatprep.subr.mxu0 0.0
        %2577 = vmatpush2.msra.mxu0 0.0
        %2578 = vmatprep.subr.mxu0 0.0
        %2579 = vmatpush2.msra.mxu0 0.0
        %2580 = vmatprep.subr.mxu0 0.0
        %2581 = vmatpush2.msra.mxu0 0.0
        %2582 = vmatprep.subr.mxu0 0.0
        %2583 = vmatpush2.msra.mxu0 0.0
        %2584 = vmatprep.subr.mxu0 0.0
        %2585 = vmatpush2.msra.mxu0 0.0
        %2586 = vmatprep.subr.mxu0 0.0
        %2587 = vmatpush2.msra.mxu0 0.0
        %2588 = vmatprep.subr.mxu0 0.0
        %2589 = vmatpush2.msra.mxu0 0.0
        %2590 = vmatprep.subr.mxu0 0.0
        %2591 = vmatpush2.msra.mxu0 0.0
        %2592 = vmatprep.subr.mxu0 0.0
        %2593 = vmatpush2.msra.mxu0 0.0
        %2594 = vmatprep.subr.mxu0 0.0
        %2595 = vmatpush2.msra.mxu0 0.0
        %2596 = vmatprep.subr.mxu0 0.0
        %2597 = vmatpush2.msra.mxu0 0.0
        %2598 = vmatprep.subr.mxu0 0.0
        %2599 = vmatpush2.msra.mxu0 0.0
        %2600 = vmatprep.mubr.f32.mxu0 0.0
        %2601 = vmatmul.mubr.f32.gmra.mxu0 %v2531
        %v2602 = vpop.f32.mrf.mxu0
        %v2603 = vadd.f32 %v2529, %v2602
        %v2604 = vpop.f32.mrf.mxu0
        %2605 = vmatprep.mubr.f32.mxu0 0.0
        %2606 = vmatmul.mubr.f32.gmra.mxu0 %v2534
        %v2607 = vpop.f32.mrf.mxu0
        %v2608 = vadd.f32 %v2529, %v2607
        %v2609 = vpop.f32.mrf.mxu0
        %2610 = vdwg.mxu0
        %2611 = vst.msk [vmem:[%s205] sm:$0xff] %vm243, %v2603
        %2612 = vst.msk [vmem:[%s205 + $0x8] sm:$0xff] %vm243, %v2608
        %s2613 = sand.u32 %s120, 1
        %s2614 = scalar_lea.sflag [#allocation3], %s2613
        %s2615 = sand.u32 %s120, 1
        %s2616 = smul.addr %s2615, 16
        %s2617 = scalar_lea.vmem [#allocation2], %s2616
        // Predicated region
        $region37: #{nmr_graph_encoder.1} parent=35 // pred_check
          %p2618 = pneg %p130
        $region38: #{nmr_graph_encoder.1} parent=35 // pred_check_branch
          %2620 = sbr.rel (%p2618) target = $region40
        $region39: #{nmr_graph_encoder.1} parent=35 // pred_region
          %s2622 = ssub.s32 256, 256
          %2623 = vsyncadd %s2614, %s2622
          %s2624 = smul.addr %s18, 2
          %s2625 = smul.addr %s2624, 128
          %s2626 = scalar_lea.hbm %s4, %s2625
          %s2627 = sshll.u32 %s2617, 4
          %s2628 = int_to_ptr.vmem [resolvable:$true] %s2627
          %2633 = dma.vmem_to_hbm [thread:$0]  %s2628, 256, %s2626, %s2614, 128, 128, 8
        $region40: #{nmr_graph_encoder.1} parent=35 // pred_fallthru
          _
      $region36: #{nmr_graph_encoder.1} parent=5 // pred_fallthru
        _
      %p2634 = scmp.le.s32.totalorder 2, %s13
      // Predicated region
      $region41: #{nmr_graph_encoder.1} parent=5 // pred_check
        %p2635 = pneg %p2634
      $region42: #{nmr_graph_encoder.1} parent=5 // pred_check_branch
        %2637 = sbr.rel (%p2635) target = $region44
      $region43: #{nmr_graph_encoder.1} parent=5 // pred_region
        %s2638 = ssub.s32 %s13, 2
        // Predicated region
        $region45: #{nmr_graph_encoder.1} parent=43 // pred_check
          %p2639 = pneg %p136
        $region46: #{nmr_graph_encoder.1} parent=43 // pred_check_branch
          %2641 = sbr.rel (%p2639) target = $region48
        $region47: #{nmr_graph_encoder.1} parent=43 // pred_region
          %s2642 = sand.u32 %s121, 1
          %s2643 = scalar_lea.sflag [#allocation3], %s2642
          %s2644 = sand.u32 %s121, 1
          %s2645 = smul.addr %s2644, 16
          %s2646 = scalar_lea.vmem [#allocation2], %s2645
          %2647 = dma.done %s2643, 256
        $region48: #{nmr_graph_encoder.1} parent=43 // pred_fallthru
          _
      $region44: #{nmr_graph_encoder.1} parent=5 // pred_fallthru
        _
    $region6: #{nmr_graph_encoder.1} parent=1 // loop_footer
      %s17 = sadd.s32 1, %s13
    $region7: #{nmr_graph_encoder.1} parent=1 // loop_footer_branch
      %12 = sbr.rel target = $region3
    $region8: #{nmr_graph_encoder.1} parent=1 // loop_exit
      _
    %2648 = vsyncpa [#allocation3], 1
    %s2649 = scalar_lea.sflag [#allocation3], 1
    %2650 = vsyncpa %s2649, 1

</llo_original>
